<compile_context>
chip_gen: v7x
topology: tpu7x:2x2x1
jax: 0.10.0
libtpu: 0.0.40
codegen_flags: <defaults>
</compile_context>

<pallas_src>
import jax
import jax.numpy as jnp
from jax import lax
from jax.experimental import pallas as pl
from jax.experimental.pallas import tpu as pltpu

HIDDEN = 128
INPUT_FEATS = 3  # t_max, t_min, t_mean


def _round_up(x, m):
    return ((x + m - 1) // m) * m


def _make_kernel(t_blk, t_actual, t_pad, hidden, unroll, act_dtype):
    """Build the kernel with static T-block size / masking / unroll baked in."""
    H = hidden
    mask_tail = (t_pad != t_actual)

    def kernel(xp_ref,     # [T_blk, B_tile, 4H]   x@W_ih^T + (b_ih+b_hh), xp dtype
               h0_ref,     # [B_tile, H]  f32
               c0_ref,     # [B_tile, H]  f32
               whh_ref,    # [H, 4H]      weight dtype
               gproj_ref,  # [B_tile, H]  f32   geo @ W1[:,H:]^T + b1 (precomputed)
               w1h_ref,    # [H, H]       weight dtype
               w2_ref,     # [1, H]       f32   dense_2 weight as a lane row
               b2_ref,     # [1, 1]       f32
               out_ref,    # [B_tile, 1]  f32
               h_sc,       # VMEM [B_tile, H]  hidden state carried over T-blocks
               c_sc):      # VMEM [B_tile, H]  cell state  carried over T-blocks
        t_idx = pl.program_id(1)

        @pl.when(t_idx == 0)
        def _init():
            h_sc[...] = h0_ref[...]
            c_sc[...] = c0_ref[...]

        wdt = whh_ref.dtype

        def step(j, hc):
            h, c = hc
            # Re-read W_hh^T from VMEM each step instead of hoisting a
            # 128x512 value across the unrolled loop (vreg pressure control).
            gates = (xp_ref[j].astype(jnp.float32)
                     + jnp.dot(h.astype(wdt), whh_ref[...],
                               preferred_element_type=jnp.float32))
            ga = gates.astype(act_dtype)
            # PyTorch LSTM gate layout: [i, f, g, o] along the 4H axis.
            i = jax.nn.sigmoid(ga[:, 0 * H:1 * H]).astype(jnp.float32)
            f = jax.nn.sigmoid(ga[:, 1 * H:2 * H]).astype(jnp.float32)
            g = jnp.tanh(ga[:, 2 * H:3 * H]).astype(jnp.float32)
            o = jax.nn.sigmoid(ga[:, 3 * H:4 * H]).astype(jnp.float32)
            c_new = f * c + i * g
            h_new = o * jnp.tanh(c_new)
            if mask_tail:
                # Padded trailing timesteps: carry state through unchanged.
                valid = (t_idx * t_blk + j) < t_actual
                h_new = jnp.where(valid, h_new, h)
                c_new = jnp.where(valid, c_new, c)
            return (h_new, c_new)

        # Partial unroll: enough LLO overlap to hide xp loads behind the
        # EUP/VALU work of the previous step without blowing the vreg file.
        h, c = lax.fori_loop(0, t_blk, step, (h_sc[...], c_sc[...]),
                             unroll=unroll)
        h_sc[...] = h
        c_sc[...] = c

        @pl.when(t_idx == pl.num_programs(1) - 1)
        def _head():
            # xs = relu(last hidden state)
            hr = jnp.maximum(h, 0.0)
            # dense_1([h, lat, lon, alt]) = h@W1[:, :H]^T + geo_proj
            d1 = (jnp.dot(hr.astype(w1h_ref.dtype), w1h_ref[...],
                          preferred_element_type=jnp.float32)
                  + gproj_ref[...])
            d1 = jnp.maximum(d1, 0.0)
            # dense_2 (out_features=1): lane reduction, not an MXU pass.
            out = jnp.sum(d1 * w2_ref[...], axis=-1, keepdims=True) + b2_ref[...]
            out_ref[...] = out.astype(out_ref.dtype)

    return kernel


def init_params(key):
    """Deterministic parameter init mirroring the PyTorch module's shapes."""
    H = HIDDEN
    ks = jax.random.split(key, 8)
    s = 1.0 / jnp.sqrt(jnp.float32(H))
    w_ih = jax.random.uniform(ks[0], (4 * H, INPUT_FEATS), jnp.float32, -s, s)
    w_hh = jax.random.uniform(ks[1], (4 * H, H), jnp.float32, -s, s)
    b_ih = jax.random.uniform(ks[2], (4 * H,), jnp.float32, -s, s)
    b_hh = jax.random.uniform(ks[3], (4 * H,), jnp.float32, -s, s)

    s1 = 1.0 / jnp.sqrt(jnp.float32(H + 3))
    w1 = jax.random.uniform(ks[4], (H, H + 3), jnp.float32, -s1, s1)  # Linear(131, 128)
    b1 = jax.random.uniform(ks[5], (H,), jnp.float32, -s1, s1)

    s2 = 1.0 / jnp.sqrt(jnp.float32(H))
    w2 = jax.random.uniform(ks[6], (1, H), jnp.float32, -s2, s2)      # Linear(128, 1)
    b2 = jax.random.uniform(ks[7], (1,), jnp.float32, -s2, s2)

    return dict(w_ih=w_ih, w_hh=w_hh, b_ih=b_ih, b_hh=b_hh,
                w1=w1, b1=b1, w2=w2, b2=b2)


def peak_blossom_forward(params, t_max, t_min, t_mean, lat, lon, alt, state_key,
                         *, h0c0=None, b_tile=None, t_blk=None,
                         weight_dtype=jnp.bfloat16, xp_dtype=jnp.bfloat16,
                         act_dtype=jnp.float32, unroll=8,
                         vmem_limit_bytes=48 * 1024 * 1024):
    """t_max/t_min/t_mean: [B, T]; lat/lon/alt: [B, 1].  Returns [B, 1].

    Defaults: bf16 weights and bf16 xp stream (MXU-native on all generations);
    gates / cell / hidden state / activations stay f32.  Set act_dtype=bf16 on
    v6e/v7x to double EUP throughput (the per-step binding unit at b_tile=128).
    """
    H = HIDDEN
    B, T = t_max.shape

    # torch.cat([...unsqueeze(-1)], dim=2) -> [B, T, 3]; go time-major [T, B, 3].
    xs = jnp.stack([t_max, t_min, t_mean], axis=-1).astype(jnp.float32)
    xs_tbf = jnp.transpose(xs, (1, 0, 2))

    # Hoisted input projection + fused LSTM biases (one XLA matmul, off the
    # recurrence's critical path):  xp[t] = x_t @ W_ih^T + (b_ih + b_hh).
    # Stored/streamed in xp_dtype (bf16 by default) to halve HBM traffic.
    wih_t = params["w_ih"].T.astype(jnp.float32)                        # [3, 4H]
    bl = (params["b_ih"] + params["b_hh"]).reshape(1, 1, 4 * H).astype(jnp.float32)
    xp = (jnp.einsum("tbf,fg->tbg", xs_tbf, wih_t) + bl).astype(xp_dtype)

    # h0/c0 = torch.randn(1, B, H): random initial states (overridable so
    # tests can inject matching states into a reference implementation).
    if h0c0 is None:
        k_h, k_c = jax.random.split(state_key)
        h0 = jax.random.normal(k_h, (B, H), jnp.float32)
        c0 = jax.random.normal(k_c, (B, H), jnp.float32)
    else:
        h0, c0 = h0c0
        h0 = h0.astype(jnp.float32)
        c0 = c0.astype(jnp.float32)

    # Geo branch of dense_1 precomputed in f32 XLA (K=3 matmul not worth MXU):
    #   geo_proj = [lat, lon, alt] @ W1[:, H:]^T + b1     -> [B, 128]
    geo = jnp.concatenate([lat, lon, alt], axis=1).astype(jnp.float32)
    w1g_t = params["w1"][:, H:].T.astype(jnp.float32)                   # [3, 128]
    gproj = geo @ w1g_t + params["b1"].reshape(1, H).astype(jnp.float32)

    # Weights, pre-transposed to (in_features, out_features).
    whh_t = params["w_hh"].T.astype(weight_dtype)                       # [H, 4H]
    w1h_t = params["w1"][:, :H].T.astype(weight_dtype)                  # [H, 128]
    w2_row = params["w2"].reshape(1, H).astype(jnp.float32)             # [1, 128]
    b2 = params["b2"].reshape(1, 1).astype(jnp.float32)                 # [1, 1]

    # Batch tiling: pad to 8 sublanes, split into >=2 blocks when possible so
    # the "parallel" batch axis can shard across v7x's 2 TensorCores; <=128
    # rows/program keeps the block within the default VMEM budget everywhere.
    if b_tile is None:
        b8 = _round_up(B, 8)
        b_tile = min(max(_round_up(-(-b8 // 2), 8), 8), 128)
    b_pad = _round_up(B, b_tile)
    # Time blocking: stream xp over T in blocks (double-buffered by Pallas).
    if t_blk is None:
        t_blk = min(T, 32)
    t_pad = _round_up(T, t_blk)

    if b_pad != B:
        pb = b_pad - B
        xp = jnp.pad(xp, ((0, 0), (0, pb), (0, 0)))
        h0 = jnp.pad(h0, ((0, pb), (0, 0)))
        c0 = jnp.pad(c0, ((0, pb), (0, 0)))
        gproj = jnp.pad(gproj, ((0, pb), (0, 0)))
    if t_pad != T:
        xp = jnp.pad(xp, ((0, t_pad - T), (0, 0), (0, 0)))

    grid = (b_pad // b_tile, t_pad // t_blk)
    kernel = _make_kernel(t_blk, T, t_pad, H, min(unroll, t_blk), act_dtype)

    out = pl.pallas_call(
        kernel,
        out_shape=jax.ShapeDtypeStruct((b_pad, 1), jnp.float32),
        grid_spec=pltpu.PrefetchScalarGridSpec(
            num_scalar_prefetch=0,
            grid=grid,
            in_specs=[
                pl.BlockSpec((t_blk, b_tile, 4 * H), lambda b, t: (t, b, 0)),  # xp
                pl.BlockSpec((b_tile, H), lambda b, t: (b, 0)),                # h0
                pl.BlockSpec((b_tile, H), lambda b, t: (b, 0)),                # c0
                pl.BlockSpec((H, 4 * H), lambda b, t: (0, 0)),                 # W_hh^T
                pl.BlockSpec((b_tile, H), lambda b, t: (b, 0)),                # geo proj
                pl.BlockSpec((H, H), lambda b, t: (0, 0)),                     # W1h^T
                pl.BlockSpec((1, H), lambda b, t: (0, 0)),                     # w2 row
                pl.BlockSpec((1, 1), lambda b, t: (0, 0)),                     # b2
            ],
            out_specs=pl.BlockSpec((b_tile, 1), lambda b, t: (b, 0)),
            scratch_shapes=[pltpu.VMEM((b_tile, H), jnp.float32),   # h carry
                            pltpu.VMEM((b_tile, H), jnp.float32)],  # c carry
        ),
        compiler_params=pltpu.CompilerParams(
            dimension_semantics=("parallel", "arbitrary"),
            vmem_limit_bytes=vmem_limit_bytes),
    )(xp, h0, c0, whh_t, gproj, w1h_t, w2_row, b2)

    # Padded batch rows carry garbage state; only the first B rows are valid.
    return out[:B]


def reference_forward(params, t_max, t_min, t_mean, lat, lon, alt, h0, c0):
    """Pure-JAX/XLA reference mirroring the PyTorch module exactly."""
    H = HIDDEN
    xs = jnp.stack([t_max, t_min, t_mean], axis=-1).astype(jnp.float32)
    w_ih, w_hh = params["w_ih"], params["w_hh"]
    b = params["b_ih"] + params["b_hh"]

    def step(carry, x_t):
        h, c = carry
        gates = x_t @ w_ih.T + h @ w_hh.T + b
        i = jax.nn.sigmoid(gates[:, 0 * H:1 * H])
        f = jax.nn.sigmoid(gates[:, 1 * H:2 * H])
        g = jnp.tanh(gates[:, 2 * H:3 * H])
        o = jax.nn.sigmoid(gates[:, 3 * H:4 * H])
        c = f * c + i * g
        h = o * jnp.tanh(c)
        return (h, c), None

    (h, _), _ = lax.scan(step, (h0, c0), jnp.transpose(xs, (1, 0, 2)))
    hr = jnp.maximum(h, 0.0)
    feat = jnp.concatenate([hr, lat, lon, alt], axis=1)
    d1 = jnp.maximum(feat @ params["w1"].T + params["b1"], 0.0)
    return d1 @ params["w2"].T + params["b2"]


if __name__ == "__main__":
    B, T = 2, 8
    key = jax.random.PRNGKey(0)
    k_par, k_state, k1, k2, k3, k4, k5, k6 = jax.random.split(key, 8)

    params = init_params(k_par)

    t_max = jax.random.normal(k1, (B, T), jnp.float32)
    t_min = jax.random.normal(k2, (B, T), jnp.float32)
    t_mean = jax.random.normal(k3, (B, T), jnp.float32)
    lat = jax.random.normal(k4, (B, 1), jnp.float32)
    lon = jax.random.normal(k5, (B, 1), jnp.float32)
    alt = jax.random.normal(k6, (B, 1), jnp.float32)

    # Fixed initial LSTM states shared by the kernel and the reference
    # (mirrors torch.randn(1, B, H) but controlled for comparability).
    k_h, k_c = jax.random.split(k_state)
    h0 = jax.random.normal(k_h, (B, HIDDEN), jnp.float32)
    c0 = jax.random.normal(k_c, (B, HIDDEN), jnp.float32)

    # Correctness check in full f32 against the pure-JAX reference.
    out_f32 = peak_blossom_forward(params, t_max, t_min, t_mean, lat, lon, alt,
                                   k_state, h0c0=(h0, c0),
                                   weight_dtype=jnp.float32,
                                   xp_dtype=jnp.float32)
    ref = reference_forward(params, t_max, t_min, t_mean, lat, lon, alt, h0, c0)
    jax.block_until_ready((out_f32, ref))
    assert out_f32.shape == (B, 1), out_f32.shape
    assert bool(jnp.allclose(out_f32, ref, rtol=2e-2, atol=2e-2)), (out_f32, ref)

    # Default (performance) configuration: bf16 weights + bf16 xp stream.
    out = peak_blossom_forward(params, t_max, t_min, t_mean, lat, lon, alt,
                               k_state, h0c0=(h0, c0))
    jax.block_until_ready(out)
    assert out.shape == (B, 1), out.shape
    assert bool(jnp.all(jnp.isfinite(out)))
    print("KERNEL_OK")
</pallas_src>

<mosaic_0001>
module attributes {stable_mosaic.version = 11 : i64} {
  func.func @kernel(%arg0: i32, %arg1: i32, %arg2: memref<8x8x512xf32, #tpu.memory_space<vmem>>, %arg3: memref<8x128xf32, #tpu.memory_space<vmem>>, %arg4: memref<8x128xf32, #tpu.memory_space<vmem>>, %arg5: memref<128x512xf32, #tpu.memory_space<vmem>>, %arg6: memref<8x128xf32, #tpu.memory_space<vmem>>, %arg7: memref<128x128xf32, #tpu.memory_space<vmem>>, %arg8: memref<1x128xf32, #tpu.memory_space<vmem>>, %arg9: memref<1x1xf32, #tpu.memory_space<vmem>>, %arg10: memref<8x1xf32, #tpu.memory_space<vmem>>, %arg11: memref<8x128xf32, #tpu.memory_space<vmem>>, %arg12: memref<8x128xf32, #tpu.memory_space<vmem>>) attributes {dimension_semantics = [#tpu.dimension_semantics<parallel>, #tpu.dimension_semantics<arbitrary>], iteration_bounds = array<i64: 1, 1>, scalar_prefetch = 0 : i64, scratch_operands = 2 : i64, tpu.core_type = #tpu.core_type<tc>, window_params = [{transform_indices = @transform_0, window_bounds = array<i64: 8, 8, 512>}, {transform_indices = @transform_1, window_bounds = array<i64: 8, 128>}, {transform_indices = @transform_2, window_bounds = array<i64: 8, 128>}, {pipeline_mode = #tpu.pipeline_mode<synchronous>, transform_indices = @transform_3, window_bounds = array<i64: 128, 512>}, {transform_indices = @transform_4, window_bounds = array<i64: 8, 128>}, {pipeline_mode = #tpu.pipeline_mode<synchronous>, transform_indices = @transform_5, window_bounds = array<i64: 128, 128>}, {pipeline_mode = #tpu.pipeline_mode<synchronous>, transform_indices = @transform_6, window_bounds = array<i64: 1, 128>}, {pipeline_mode = #tpu.pipeline_mode<synchronous>, transform_indices = @transform_7, window_bounds = array<i64: 1, 1>}, {transform_indices = @transform_8, window_bounds = array<i64: 8, 1>}]} {
    %c0_i32 = arith.constant 0 : i32
    %0 = arith.cmpi eq, %arg1, %c0_i32 : i32
    %1 = arith.extui %0 : i1 to i32
    %c0_i32_0 = arith.constant 0 : i32
    %2 = arith.cmpi ne, %1, %c0_i32_0 : i32
    scf.if %2 {
      %c0_74 = arith.constant 0 : index
      %c0_75 = arith.constant 0 : index
      %258 = vector.load %arg3[%c0_74, %c0_75] : memref<8x128xf32, #tpu.memory_space<vmem>>, vector<8x128xf32>
      %c0_76 = arith.constant 0 : index
      %c0_77 = arith.constant 0 : index
      %259 = vector.load %arg11[%c0_76, %c0_77] : memref<8x128xf32, #tpu.memory_space<vmem>>, vector<8x128xf32>
      tpu.vector_store %arg11[%c0_76, %c0_77], %258 {strides = array<i32>} : memref<8x128xf32, #tpu.memory_space<vmem>>, vector<8x128xf32>,
      %c0_78 = arith.constant 0 : index
      %c0_79 = arith.constant 0 : index
      %260 = vector.load %arg4[%c0_78, %c0_79] : memref<8x128xf32, #tpu.memory_space<vmem>>, vector<8x128xf32>
      %c0_80 = arith.constant 0 : index
      %c0_81 = arith.constant 0 : index
      %261 = vector.load %arg12[%c0_80, %c0_81] : memref<8x128xf32, #tpu.memory_space<vmem>>, vector<8x128xf32>
      tpu.vector_store %arg12[%c0_80, %c0_81], %260 {strides = array<i32>} : memref<8x128xf32, #tpu.memory_space<vmem>>, vector<8x128xf32>,
    } else {
    }
    %c0 = arith.constant 0 : index
    %c0_1 = arith.constant 0 : index
    %3 = vector.load %arg11[%c0, %c0_1] : memref<8x128xf32, #tpu.memory_space<vmem>>, vector<8x128xf32>
    %c0_2 = arith.constant 0 : index
    %c0_3 = arith.constant 0 : index
    %4 = vector.load %arg12[%c0_2, %c0_3] : memref<8x128xf32, #tpu.memory_space<vmem>>, vector<8x128xf32>
    %c0_i32_4 = arith.constant 0 : i32
    %5 = arith.index_cast %c0_i32_4 : i32 to index
    %c0_5 = arith.constant 0 : index
    %c0_6 = arith.constant 0 : index
    %6 = vector.load %arg2[%5, %c0_5, %c0_6] : memref<8x8x512xf32, #tpu.memory_space<vmem>>, vector<1x8x512xf32>
    %7 = vector.shape_cast %6 : vector<1x8x512xf32> to vector<8x512xf32>
    %c0_7 = arith.constant 0 : index
    %c0_8 = arith.constant 0 : index
    %8 = vector.load %arg5[%c0_7, %c0_8] : memref<128x512xf32, #tpu.memory_space<vmem>>, vector<128x512xf32>
    %cst = arith.constant dense<0.000000e+00> : vector<8x512xf32>
    %9 = tpu.matmul %3, %8, %cst {dimension_numbers = #tpu.dot_dimension_numbers<[1], [0], [0], [1], [0, 0, 1, 1], [], []>} : vector<8x128xf32>, vector<128x512xf32>, vector<8x512xf32> -> vector<8x512xf32>
    %10 = arith.addf %7, %9 : vector<8x512xf32>
    %11 = vector.extract_strided_slice %10 {offsets = [0, 0], sizes = [8, 128], strides = [1, 1]} : vector<8x512xf32> to vector<8x128xf32>
    %12 = arith.negf %11 : vector<8x128xf32>
    %13 = math.exp %12 : vector<8x128xf32>
    %cst_9 = arith.constant 1.000000e+00 : f32
    %14 = vector.broadcast %cst_9 : f32 to vector<8x128xf32>
    %15 = arith.addf %14, %13 : vector<8x128xf32>
    %16 = arith.divf %14, %15 : vector<8x128xf32>
    %17 = vector.extract_strided_slice %10 {offsets = [0, 128], sizes = [8, 128], strides = [1, 1]} : vector<8x512xf32> to vector<8x128xf32>
    %18 = arith.negf %17 : vector<8x128xf32>
    %19 = math.exp %18 : vector<8x128xf32>
    %cst_10 = arith.constant 1.000000e+00 : f32
    %20 = vector.broadcast %cst_10 : f32 to vector<8x128xf32>
    %21 = arith.addf %20, %19 : vector<8x128xf32>
    %22 = arith.divf %20, %21 : vector<8x128xf32>
    %23 = vector.extract_strided_slice %10 {offsets = [0, 256], sizes = [8, 128], strides = [1, 1]} : vector<8x512xf32> to vector<8x128xf32>
    %24 = math.tanh %23 : vector<8x128xf32>
    %25 = vector.extract_strided_slice %10 {offsets = [0, 384], sizes = [8, 128], strides = [1, 1]} : vector<8x512xf32> to vector<8x128xf32>
    %26 = arith.negf %25 : vector<8x128xf32>
    %27 = math.exp %26 : vector<8x128xf32>
    %cst_11 = arith.constant 1.000000e+00 : f32
    %28 = vector.broadcast %cst_11 : f32 to vector<8x128xf32>
    %29 = arith.addf %28, %27 : vector<8x128xf32>
    %30 = arith.divf %28, %29 : vector<8x128xf32>
    %31 = arith.mulf %22, %4 : vector<8x128xf32>
    %32 = arith.mulf %16, %24 : vector<8x128xf32>
    %33 = arith.addf %31, %32 : vector<8x128xf32>
    %34 = math.tanh %33 : vector<8x128xf32>
    %35 = arith.mulf %30, %34 : vector<8x128xf32>
    %c1_i32 = arith.constant 1 : i32
    %36 = arith.index_cast %c1_i32 : i32 to index
    %c0_12 = arith.constant 0 : index
    %c0_13 = arith.constant 0 : index
    %37 = vector.load %arg2[%36, %c0_12, %c0_13] : memref<8x8x512xf32, #tpu.memory_space<vmem>>, vector<1x8x512xf32>
    %38 = vector.shape_cast %37 : vector<1x8x512xf32> to vector<8x512xf32>
    %c0_14 = arith.constant 0 : index
    %c0_15 = arith.constant 0 : index
    %39 = vector.load %arg5[%c0_14, %c0_15] : memref<128x512xf32, #tpu.memory_space<vmem>>, vector<128x512xf32>
    %cst_16 = arith.constant dense<0.000000e+00> : vector<8x512xf32>
    %40 = tpu.matmul %35, %39, %cst_16 {dimension_numbers = #tpu.dot_dimension_numbers<[1], [0], [0], [1], [0, 0, 1, 1], [], []>} : vector<8x128xf32>, vector<128x512xf32>, vector<8x512xf32> -> vector<8x512xf32>
    %41 = arith.addf %38, %40 : vector<8x512xf32>
    %42 = vector.extract_strided_slice %41 {offsets = [0, 0], sizes = [8, 128], strides = [1, 1]} : vector<8x512xf32> to vector<8x128xf32>
    %43 = arith.negf %42 : vector<8x128xf32>
    %44 = math.exp %43 : vector<8x128xf32>
    %cst_17 = arith.constant 1.000000e+00 : f32
    %45 = vector.broadcast %cst_17 : f32 to vector<8x128xf32>
    %46 = arith.addf %45, %44 : vector<8x128xf32>
    %47 = arith.divf %45, %46 : vector<8x128xf32>
    %48 = vector.extract_strided_slice %41 {offsets = [0, 128], sizes = [8, 128], strides = [1, 1]} : vector<8x512xf32> to vector<8x128xf32>
    %49 = arith.negf %48 : vector<8x128xf32>
    %50 = math.exp %49 : vector<8x128xf32>
    %cst_18 = arith.constant 1.000000e+00 : f32
    %51 = vector.broadcast %cst_18 : f32 to vector<8x128xf32>
    %52 = arith.addf %51, %50 : vector<8x128xf32>
    %53 = arith.divf %51, %52 : vector<8x128xf32>
    %54 = vector.extract_strided_slice %41 {offsets = [0, 256], sizes = [8, 128], strides = [1, 1]} : vector<8x512xf32> to vector<8x128xf32>
    %55 = math.tanh %54 : vector<8x128xf32>
    %56 = vector.extract_strided_slice %41 {offsets = [0, 384], sizes = [8, 128], strides = [1, 1]} : vector<8x512xf32> to vector<8x128xf32>
    %57 = arith.negf %56 : vector<8x128xf32>
    %58 = math.exp %57 : vector<8x128xf32>
    %cst_19 = arith.constant 1.000000e+00 : f32
    %59 = vector.broadcast %cst_19 : f32 to vector<8x128xf32>
    %60 = arith.addf %59, %58 : vector<8x128xf32>
    %61 = arith.divf %59, %60 : vector<8x128xf32>
    %62 = arith.mulf %53, %33 : vector<8x128xf32>
    %63 = arith.mulf %47, %55 : vector<8x128xf32>
    %64 = arith.addf %62, %63 : vector<8x128xf32>
    %65 = math.tanh %64 : vector<8x128xf32>
    %66 = arith.mulf %61, %65 : vector<8x128xf32>
    %c2_i32 = arith.constant 2 : i32
    %67 = arith.index_cast %c2_i32 : i32 to index
    %c0_20 = arith.constant 0 : index
    %c0_21 = arith.constant 0 : index
    %68 = vector.load %arg2[%67, %c0_20, %c0_21] : memref<8x8x512xf32, #tpu.memory_space<vmem>>, vector<1x8x512xf32>
    %69 = vector.shape_cast %68 : vector<1x8x512xf32> to vector<8x512xf32>
    %c0_22 = arith.constant 0 : index
    %c0_23 = arith.constant 0 : index
    %70 = vector.load %arg5[%c0_22, %c0_23] : memref<128x512xf32, #tpu.memory_space<vmem>>, vector<128x512xf32>
    %cst_24 = arith.constant dense<0.000000e+00> : vector<8x512xf32>
    %71 = tpu.matmul %66, %70, %cst_24 {dimension_numbers = #tpu.dot_dimension_numbers<[1], [0], [0], [1], [0, 0, 1, 1], [], []>} : vector<8x128xf32>, vector<128x512xf32>, vector<8x512xf32> -> vector<8x512xf32>
    %72 = arith.addf %69, %71 : vector<8x512xf32>
    %73 = vector.extract_strided_slice %72 {offsets = [0, 0], sizes = [8, 128], strides = [1, 1]} : vector<8x512xf32> to vector<8x128xf32>
    %74 = arith.negf %73 : vector<8x128xf32>
    %75 = math.exp %74 : vector<8x128xf32>
    %cst_25 = arith.constant 1.000000e+00 : f32
    %76 = vector.broadcast %cst_25 : f32 to vector<8x128xf32>
    %77 = arith.addf %76, %75 : vector<8x128xf32>
    %78 = arith.divf %76, %77 : vector<8x128xf32>
    %79 = vector.extract_strided_slice %72 {offsets = [0, 128], sizes = [8, 128], strides = [1, 1]} : vector<8x512xf32> to vector<8x128xf32>
    %80 = arith.negf %79 : vector<8x128xf32>
    %81 = math.exp %80 : vector<8x128xf32>
    %cst_26 = arith.constant 1.000000e+00 : f32
    %82 = vector.broadcast %cst_26 : f32 to vector<8x128xf32>
    %83 = arith.addf %82, %81 : vector<8x128xf32>
    %84 = arith.divf %82, %83 : vector<8x128xf32>
    %85 = vector.extract_strided_slice %72 {offsets = [0, 256], sizes = [8, 128], strides = [1, 1]} : vector<8x512xf32> to vector<8x128xf32>
    %86 = math.tanh %85 : vector<8x128xf32>
    %87 = vector.extract_strided_slice %72 {offsets = [0, 384], sizes = [8, 128], strides = [1, 1]} : vector<8x512xf32> to vector<8x128xf32>
    %88 = arith.negf %87 : vector<8x128xf32>
    %89 = math.exp %88 : vector<8x128xf32>
    %cst_27 = arith.constant 1.000000e+00 : f32
    %90 = vector.broadcast %cst_27 : f32 to vector<8x128xf32>
    %91 = arith.addf %90, %89 : vector<8x128xf32>
    %92 = arith.divf %90, %91 : vector<8x128xf32>
    %93 = arith.mulf %84, %64 : vector<8x128xf32>
    %94 = arith.mulf %78, %86 : vector<8x128xf32>
    %95 = arith.addf %93, %94 : vector<8x128xf32>
    %96 = math.tanh %95 : vector<8x128xf32>
    %97 = arith.mulf %92, %96 : vector<8x128xf32>
    %c3_i32 = arith.constant 3 : i32
    %98 = arith.index_cast %c3_i32 : i32 to index
    %c0_28 = arith.constant 0 : index
    %c0_29 = arith.constant 0 : index
    %99 = vector.load %arg2[%98, %c0_28, %c0_29] : memref<8x8x512xf32, #tpu.memory_space<vmem>>, vector<1x8x512xf32>
    %100 = vector.shape_cast %99 : vector<1x8x512xf32> to vector<8x512xf32>
    %c0_30 = arith.constant 0 : index
    %c0_31 = arith.constant 0 : index
    %101 = vector.load %arg5[%c0_30, %c0_31] : memref<128x512xf32, #tpu.memory_space<vmem>>, vector<128x512xf32>
    %cst_32 = arith.constant dense<0.000000e+00> : vector<8x512xf32>
    %102 = tpu.matmul %97, %101, %cst_32 {dimension_numbers = #tpu.dot_dimension_numbers<[1], [0], [0], [1], [0, 0, 1, 1], [], []>} : vector<8x128xf32>, vector<128x512xf32>, vector<8x512xf32> -> vector<8x512xf32>
    %103 = arith.addf %100, %102 : vector<8x512xf32>
    %104 = vector.extract_strided_slice %103 {offsets = [0, 0], sizes = [8, 128], strides = [1, 1]} : vector<8x512xf32> to vector<8x128xf32>
    %105 = arith.negf %104 : vector<8x128xf32>
    %106 = math.exp %105 : vector<8x128xf32>
    %cst_33 = arith.constant 1.000000e+00 : f32
    %107 = vector.broadcast %cst_33 : f32 to vector<8x128xf32>
    %108 = arith.addf %107, %106 : vector<8x128xf32>
    %109 = arith.divf %107, %108 : vector<8x128xf32>
    %110 = vector.extract_strided_slice %103 {offsets = [0, 128], sizes = [8, 128], strides = [1, 1]} : vector<8x512xf32> to vector<8x128xf32>
    %111 = arith.negf %110 : vector<8x128xf32>
    %112 = math.exp %111 : vector<8x128xf32>
    %cst_34 = arith.constant 1.000000e+00 : f32
    %113 = vector.broadcast %cst_34 : f32 to vector<8x128xf32>
    %114 = arith.addf %113, %112 : vector<8x128xf32>
    %115 = arith.divf %113, %114 : vector<8x128xf32>
    %116 = vector.extract_strided_slice %103 {offsets = [0, 256], sizes = [8, 128], strides = [1, 1]} : vector<8x512xf32> to vector<8x128xf32>
    %117 = math.tanh %116 : vector<8x128xf32>
    %118 = vector.extract_strided_slice %103 {offsets = [0, 384], sizes = [8, 128], strides = [1, 1]} : vector<8x512xf32> to vector<8x128xf32>
    %119 = arith.negf %118 : vector<8x128xf32>
    %120 = math.exp %119 : vector<8x128xf32>
    %cst_35 = arith.constant 1.000000e+00 : f32
    %121 = vector.broadcast %cst_35 : f32 to vector<8x128xf32>
    %122 = arith.addf %121, %120 : vector<8x128xf32>
    %123 = arith.divf %121, %122 : vector<8x128xf32>
    %124 = arith.mulf %115, %95 : vector<8x128xf32>
    %125 = arith.mulf %109, %117 : vector<8x128xf32>
    %126 = arith.addf %124, %125 : vector<8x128xf32>
    %127 = math.tanh %126 : vector<8x128xf32>
    %128 = arith.mulf %123, %127 : vector<8x128xf32>
    %c4_i32 = arith.constant 4 : i32
    %129 = arith.index_cast %c4_i32 : i32 to index
    %c0_36 = arith.constant 0 : index
    %c0_37 = arith.constant 0 : index
    %130 = vector.load %arg2[%129, %c0_36, %c0_37] : memref<8x8x512xf32, #tpu.memory_space<vmem>>, vector<1x8x512xf32>
    %131 = vector.shape_cast %130 : vector<1x8x512xf32> to vector<8x512xf32>
    %c0_38 = arith.constant 0 : index
    %c0_39 = arith.constant 0 : index
    %132 = vector.load %arg5[%c0_38, %c0_39] : memref<128x512xf32, #tpu.memory_space<vmem>>, vector<128x512xf32>
    %cst_40 = arith.constant dense<0.000000e+00> : vector<8x512xf32>
    %133 = tpu.matmul %128, %132, %cst_40 {dimension_numbers = #tpu.dot_dimension_numbers<[1], [0], [0], [1], [0, 0, 1, 1], [], []>} : vector<8x128xf32>, vector<128x512xf32>, vector<8x512xf32> -> vector<8x512xf32>
    %134 = arith.addf %131, %133 : vector<8x512xf32>
    %135 = vector.extract_strided_slice %134 {offsets = [0, 0], sizes = [8, 128], strides = [1, 1]} : vector<8x512xf32> to vector<8x128xf32>
    %136 = arith.negf %135 : vector<8x128xf32>
    %137 = math.exp %136 : vector<8x128xf32>
    %cst_41 = arith.constant 1.000000e+00 : f32
    %138 = vector.broadcast %cst_41 : f32 to vector<8x128xf32>
    %139 = arith.addf %138, %137 : vector<8x128xf32>
    %140 = arith.divf %138, %139 : vector<8x128xf32>
    %141 = vector.extract_strided_slice %134 {offsets = [0, 128], sizes = [8, 128], strides = [1, 1]} : vector<8x512xf32> to vector<8x128xf32>
    %142 = arith.negf %141 : vector<8x128xf32>
    %143 = math.exp %142 : vector<8x128xf32>
    %cst_42 = arith.constant 1.000000e+00 : f32
    %144 = vector.broadcast %cst_42 : f32 to vector<8x128xf32>
    %145 = arith.addf %144, %143 : vector<8x128xf32>
    %146 = arith.divf %144, %145 : vector<8x128xf32>
    %147 = vector.extract_strided_slice %134 {offsets = [0, 256], sizes = [8, 128], strides = [1, 1]} : vector<8x512xf32> to vector<8x128xf32>
    %148 = math.tanh %147 : vector<8x128xf32>
    %149 = vector.extract_strided_slice %134 {offsets = [0, 384], sizes = [8, 128], strides = [1, 1]} : vector<8x512xf32> to vector<8x128xf32>
    %150 = arith.negf %149 : vector<8x128xf32>
    %151 = math.exp %150 : vector<8x128xf32>
    %cst_43 = arith.constant 1.000000e+00 : f32
    %152 = vector.broadcast %cst_43 : f32 to vector<8x128xf32>
    %153 = arith.addf %152, %151 : vector<8x128xf32>
    %154 = arith.divf %152, %153 : vector<8x128xf32>
    %155 = arith.mulf %146, %126 : vector<8x128xf32>
    %156 = arith.mulf %140, %148 : vector<8x128xf32>
    %157 = arith.addf %155, %156 : vector<8x128xf32>
    %158 = math.tanh %157 : vector<8x128xf32>
    %159 = arith.mulf %154, %158 : vector<8x128xf32>
    %c5_i32 = arith.constant 5 : i32
    %160 = arith.index_cast %c5_i32 : i32 to index
    %c0_44 = arith.constant 0 : index
    %c0_45 = arith.constant 0 : index
    %161 = vector.load %arg2[%160, %c0_44, %c0_45] : memref<8x8x512xf32, #tpu.memory_space<vmem>>, vector<1x8x512xf32>
    %162 = vector.shape_cast %161 : vector<1x8x512xf32> to vector<8x512xf32>
    %c0_46 = arith.constant 0 : index
    %c0_47 = arith.constant 0 : index
    %163 = vector.load %arg5[%c0_46, %c0_47] : memref<128x512xf32, #tpu.memory_space<vmem>>, vector<128x512xf32>
    %cst_48 = arith.constant dense<0.000000e+00> : vector<8x512xf32>
    %164 = tpu.matmul %159, %163, %cst_48 {dimension_numbers = #tpu.dot_dimension_numbers<[1], [0], [0], [1], [0, 0, 1, 1], [], []>} : vector<8x128xf32>, vector<128x512xf32>, vector<8x512xf32> -> vector<8x512xf32>
    %165 = arith.addf %162, %164 : vector<8x512xf32>
    %166 = vector.extract_strided_slice %165 {offsets = [0, 0], sizes = [8, 128], strides = [1, 1]} : vector<8x512xf32> to vector<8x128xf32>
    %167 = arith.negf %166 : vector<8x128xf32>
    %168 = math.exp %167 : vector<8x128xf32>
    %cst_49 = arith.constant 1.000000e+00 : f32
    %169 = vector.broadcast %cst_49 : f32 to vector<8x128xf32>
    %170 = arith.addf %169, %168 : vector<8x128xf32>
    %171 = arith.divf %169, %170 : vector<8x128xf32>
    %172 = vector.extract_strided_slice %165 {offsets = [0, 128], sizes = [8, 128], strides = [1, 1]} : vector<8x512xf32> to vector<8x128xf32>
    %173 = arith.negf %172 : vector<8x128xf32>
    %174 = math.exp %173 : vector<8x128xf32>
    %cst_50 = arith.constant 1.000000e+00 : f32
    %175 = vector.broadcast %cst_50 : f32 to vector<8x128xf32>
    %176 = arith.addf %175, %174 : vector<8x128xf32>
    %177 = arith.divf %175, %176 : vector<8x128xf32>
    %178 = vector.extract_strided_slice %165 {offsets = [0, 256], sizes = [8, 128], strides = [1, 1]} : vector<8x512xf32> to vector<8x128xf32>
    %179 = math.tanh %178 : vector<8x128xf32>
    %180 = vector.extract_strided_slice %165 {offsets = [0, 384], sizes = [8, 128], strides = [1, 1]} : vector<8x512xf32> to vector<8x128xf32>
    %181 = arith.negf %180 : vector<8x128xf32>
    %182 = math.exp %181 : vector<8x128xf32>
    %cst_51 = arith.constant 1.000000e+00 : f32
    %183 = vector.broadcast %cst_51 : f32 to vector<8x128xf32>
    %184 = arith.addf %183, %182 : vector<8x128xf32>
    %185 = arith.divf %183, %184 : vector<8x128xf32>
    %186 = arith.mulf %177, %157 : vector<8x128xf32>
    %187 = arith.mulf %171, %179 : vector<8x128xf32>
    %188 = arith.addf %186, %187 : vector<8x128xf32>
    %189 = math.tanh %188 : vector<8x128xf32>
    %190 = arith.mulf %185, %189 : vector<8x128xf32>
    %c6_i32 = arith.constant 6 : i32
    %191 = arith.index_cast %c6_i32 : i32 to index
    %c0_52 = arith.constant 0 : index
    %c0_53 = arith.constant 0 : index
    %192 = vector.load %arg2[%191, %c0_52, %c0_53] : memref<8x8x512xf32, #tpu.memory_space<vmem>>, vector<1x8x512xf32>
    %193 = vector.shape_cast %192 : vector<1x8x512xf32> to vector<8x512xf32>
    %c0_54 = arith.constant 0 : index
    %c0_55 = arith.constant 0 : index
    %194 = vector.load %arg5[%c0_54, %c0_55] : memref<128x512xf32, #tpu.memory_space<vmem>>, vector<128x512xf32>
    %cst_56 = arith.constant dense<0.000000e+00> : vector<8x512xf32>
    %195 = tpu.matmul %190, %194, %cst_56 {dimension_numbers = #tpu.dot_dimension_numbers<[1], [0], [0], [1], [0, 0, 1, 1], [], []>} : vector<8x128xf32>, vector<128x512xf32>, vector<8x512xf32> -> vector<8x512xf32>
    %196 = arith.addf %193, %195 : vector<8x512xf32>
    %197 = vector.extract_strided_slice %196 {offsets = [0, 0], sizes = [8, 128], strides = [1, 1]} : vector<8x512xf32> to vector<8x128xf32>
    %198 = arith.negf %197 : vector<8x128xf32>
    %199 = math.exp %198 : vector<8x128xf32>
    %cst_57 = arith.constant 1.000000e+00 : f32
    %200 = vector.broadcast %cst_57 : f32 to vector<8x128xf32>
    %201 = arith.addf %200, %199 : vector<8x128xf32>
    %202 = arith.divf %200, %201 : vector<8x128xf32>
    %203 = vector.extract_strided_slice %196 {offsets = [0, 128], sizes = [8, 128], strides = [1, 1]} : vector<8x512xf32> to vector<8x128xf32>
    %204 = arith.negf %203 : vector<8x128xf32>
    %205 = math.exp %204 : vector<8x128xf32>
    %cst_58 = arith.constant 1.000000e+00 : f32
    %206 = vector.broadcast %cst_58 : f32 to vector<8x128xf32>
    %207 = arith.addf %206, %205 : vector<8x128xf32>
    %208 = arith.divf %206, %207 : vector<8x128xf32>
    %209 = vector.extract_strided_slice %196 {offsets = [0, 256], sizes = [8, 128], strides = [1, 1]} : vector<8x512xf32> to vector<8x128xf32>
    %210 = math.tanh %209 : vector<8x128xf32>
    %211 = vector.extract_strided_slice %196 {offsets = [0, 384], sizes = [8, 128], strides = [1, 1]} : vector<8x512xf32> to vector<8x128xf32>
    %212 = arith.negf %211 : vector<8x128xf32>
    %213 = math.exp %212 : vector<8x128xf32>
    %cst_59 = arith.constant 1.000000e+00 : f32
    %214 = vector.broadcast %cst_59 : f32 to vector<8x128xf32>
    %215 = arith.addf %214, %213 : vector<8x128xf32>
    %216 = arith.divf %214, %215 : vector<8x128xf32>
    %217 = arith.mulf %208, %188 : vector<8x128xf32>
    %218 = arith.mulf %202, %210 : vector<8x128xf32>
    %219 = arith.addf %217, %218 : vector<8x128xf32>
    %220 = math.tanh %219 : vector<8x128xf32>
    %221 = arith.mulf %216, %220 : vector<8x128xf32>
    %c7_i32 = arith.constant 7 : i32
    %222 = arith.index_cast %c7_i32 : i32 to index
    %c0_60 = arith.constant 0 : index
    %c0_61 = arith.constant 0 : index
    %223 = vector.load %arg2[%222, %c0_60, %c0_61] : memref<8x8x512xf32, #tpu.memory_space<vmem>>, vector<1x8x512xf32>
    %224 = vector.shape_cast %223 : vector<1x8x512xf32> to vector<8x512xf32>
    %c0_62 = arith.constant 0 : index
    %c0_63 = arith.constant 0 : index
    %225 = vector.load %arg5[%c0_62, %c0_63] : memref<128x512xf32, #tpu.memory_space<vmem>>, vector<128x512xf32>
    %cst_64 = arith.constant dense<0.000000e+00> : vector<8x512xf32>
    %226 = tpu.matmul %221, %225, %cst_64 {dimension_numbers = #tpu.dot_dimension_numbers<[1], [0], [0], [1], [0, 0, 1, 1], [], []>} : vector<8x128xf32>, vector<128x512xf32>, vector<8x512xf32> -> vector<8x512xf32>
    %227 = arith.addf %224, %226 : vector<8x512xf32>
    %228 = vector.extract_strided_slice %227 {offsets = [0, 0], sizes = [8, 128], strides = [1, 1]} : vector<8x512xf32> to vector<8x128xf32>
    %229 = arith.negf %228 : vector<8x128xf32>
    %230 = math.exp %229 : vector<8x128xf32>
    %cst_65 = arith.constant 1.000000e+00 : f32
    %231 = vector.broadcast %cst_65 : f32 to vector<8x128xf32>
    %232 = arith.addf %231, %230 : vector<8x128xf32>
    %233 = arith.divf %231, %232 : vector<8x128xf32>
    %234 = vector.extract_strided_slice %227 {offsets = [0, 128], sizes = [8, 128], strides = [1, 1]} : vector<8x512xf32> to vector<8x128xf32>
    %235 = arith.negf %234 : vector<8x128xf32>
    %236 = math.exp %235 : vector<8x128xf32>
    %cst_66 = arith.constant 1.000000e+00 : f32
    %237 = vector.broadcast %cst_66 : f32 to vector<8x128xf32>
    %238 = arith.addf %237, %236 : vector<8x128xf32>
    %239 = arith.divf %237, %238 : vector<8x128xf32>
    %240 = vector.extract_strided_slice %227 {offsets = [0, 256], sizes = [8, 128], strides = [1, 1]} : vector<8x512xf32> to vector<8x128xf32>
    %241 = math.tanh %240 : vector<8x128xf32>
    %242 = vector.extract_strided_slice %227 {offsets = [0, 384], sizes = [8, 128], strides = [1, 1]} : vector<8x512xf32> to vector<8x128xf32>
    %243 = arith.negf %242 : vector<8x128xf32>
    %244 = math.exp %243 : vector<8x128xf32>
    %cst_67 = arith.constant 1.000000e+00 : f32
    %245 = vector.broadcast %cst_67 : f32 to vector<8x128xf32>
    %246 = arith.addf %245, %244 : vector<8x128xf32>
    %247 = arith.divf %245, %246 : vector<8x128xf32>
    %248 = arith.mulf %239, %219 : vector<8x128xf32>
    %249 = arith.mulf %233, %241 : vector<8x128xf32>
    %250 = arith.addf %248, %249 : vector<8x128xf32>
    %251 = math.tanh %250 : vector<8x128xf32>
    %252 = arith.mulf %247, %251 : vector<8x128xf32>
    %c8_i32 = arith.constant 8 : i32
    %c0_68 = arith.constant 0 : index
    %c0_69 = arith.constant 0 : index
    %253 = vector.load %arg11[%c0_68, %c0_69] : memref<8x128xf32, #tpu.memory_space<vmem>>, vector<8x128xf32>
    tpu.vector_store %arg11[%c0_68, %c0_69], %252 {strides = array<i32>} : memref<8x128xf32, #tpu.memory_space<vmem>>, vector<8x128xf32>,
    %c0_70 = arith.constant 0 : index
    %c0_71 = arith.constant 0 : index
    %254 = vector.load %arg12[%c0_70, %c0_71] : memref<8x128xf32, #tpu.memory_space<vmem>>, vector<8x128xf32>
    tpu.vector_store %arg12[%c0_70, %c0_71], %250 {strides = array<i32>} : memref<8x128xf32, #tpu.memory_space<vmem>>, vector<8x128xf32>,
    %c0_i32_72 = arith.constant 0 : i32
    %255 = arith.cmpi eq, %arg1, %c0_i32_72 : i32
    %256 = arith.extui %255 : i1 to i32
    %c0_i32_73 = arith.constant 0 : i32
    %257 = arith.cmpi ne, %256, %c0_i32_73 : i32
    scf.if %257 {
      %cst_74 = arith.constant 0.000000e+00 : f32
      %258 = vector.broadcast %cst_74 : f32 to vector<8x128xf32>
      %259 = arith.maximumf %252, %258 : vector<8x128xf32>
      %c0_75 = arith.constant 0 : index
      %c0_76 = arith.constant 0 : index
      %260 = vector.load %arg7[%c0_75, %c0_76] : memref<128x128xf32, #tpu.memory_space<vmem>>, vector<128x128xf32>
      %cst_77 = arith.constant dense<0.000000e+00> : vector<8x128xf32>
      %261 = tpu.matmul %259, %260, %cst_77 {dimension_numbers = #tpu.dot_dimension_numbers<[1], [0], [0], [1], [0, 0, 1, 1], [], []>} : vector<8x128xf32>, vector<128x128xf32>, vector<8x128xf32> -> vector<8x128xf32>
      %c0_78 = arith.constant 0 : index
      %c0_79 = arith.constant 0 : index
      %262 = vector.load %arg6[%c0_78, %c0_79] : memref<8x128xf32, #tpu.memory_space<vmem>>, vector<8x128xf32>
      %263 = arith.addf %261, %262 : vector<8x128xf32>
      %cst_80 = arith.constant 0.000000e+00 : f32
      %264 = vector.broadcast %cst_80 : f32 to vector<8x128xf32>
      %265 = arith.maximumf %263, %264 : vector<8x128xf32>
      %c0_81 = arith.constant 0 : index
      %c0_82 = arith.constant 0 : index
      %266 = vector.load %arg8[%c0_81, %c0_82] : memref<1x128xf32, #tpu.memory_space<vmem>>, vector<1x128xf32>
      %267 = vector.broadcast %266 : vector<1x128xf32> to vector<8x128xf32>
      %268 = arith.mulf %265, %267 : vector<8x128xf32>
      %cst_83 = arith.constant dense<0.000000e+00> : vector<8xf32>
      %269 = vector.multi_reduction <add>, %268, %cst_83 [1] : vector<8x128xf32> to vector<8xf32>
      %270 = vector.shape_cast %269 : vector<8xf32> to vector<8x1xf32>
      %c0_84 = arith.constant 0 : index
      %c0_85 = arith.constant 0 : index
      %271 = vector.load %arg9[%c0_84, %c0_85] : memref<1x1xf32, #tpu.memory_space<vmem>>, vector<1x1xf32>
      %272 = vector.broadcast %271 : vector<1x1xf32> to vector<8x1xf32>
      %273 = arith.addf %270, %272 : vector<8x1xf32>
      %c0_86 = arith.constant 0 : index
      %c0_87 = arith.constant 0 : index
      %274 = vector.load %arg10[%c0_86, %c0_87] : memref<8x1xf32, #tpu.memory_space<vmem>>, vector<8x1xf32>
      tpu.vector_store %arg10[%c0_86, %c0_87], %273 {strides = array<i32>} : memref<8x1xf32, #tpu.memory_space<vmem>>, vector<8x1xf32>,
    } else {
    }
    return
  }
  func.func @transform_0(%arg0: i32, %arg1: i32) -> (i32, i32, i32) {
    %c0_i32 = arith.constant 0 : i32
    %c0_i32_0 = arith.constant 0 : i32
    return %arg1, %arg0, %c0_i32 : i32, i32, i32
  }
  func.func @transform_1(%arg0: i32, %arg1: i32) -> (i32, i32) {
    %c0_i32 = arith.constant 0 : i32
    %c0_i32_0 = arith.constant 0 : i32
    return %arg0, %c0_i32 : i32, i32
  }
  func.func @transform_2(%arg0: i32, %arg1: i32) -> (i32, i32) {
    %c0_i32 = arith.constant 0 : i32
    %c0_i32_0 = arith.constant 0 : i32
    return %arg0, %c0_i32 : i32, i32
  }
  func.func @transform_3(%arg0: i32, %arg1: i32) -> (i32, i32) {
    %c0_i32 = arith.constant 0 : i32
    %c0_i32_0 = arith.constant 0 : i32
    %c0_i32_1 = arith.constant 0 : i32
    return %c0_i32, %c0_i32_0 : i32, i32
  }
  func.func @transform_4(%arg0: i32, %arg1: i32) -> (i32, i32) {
    %c0_i32 = arith.constant 0 : i32
    %c0_i32_0 = arith.constant 0 : i32
    return %arg0, %c0_i32 : i32, i32
  }
  func.func @transform_5(%arg0: i32, %arg1: i32) -> (i32, i32) {
    %c0_i32 = arith.constant 0 : i32
    %c0_i32_0 = arith.constant 0 : i32
    %c0_i32_1 = arith.constant 0 : i32
    return %c0_i32, %c0_i32_0 : i32, i32
  }
  func.func @transform_6(%arg0: i32, %arg1: i32) -> (i32, i32) {
    %c0_i32 = arith.constant 0 : i32
    %c0_i32_0 = arith.constant 0 : i32
    %c0_i32_1 = arith.constant 0 : i32
    return %c0_i32, %c0_i32_0 : i32, i32
  }
  func.func @transform_7(%arg0: i32, %arg1: i32) -> (i32, i32) {
    %c0_i32 = arith.constant 0 : i32
    %c0_i32_0 = arith.constant 0 : i32
    %c0_i32_1 = arith.constant 0 : i32
    return %c0_i32, %c0_i32_0 : i32, i32
  }
  func.func @transform_8(%arg0: i32, %arg1: i32) -> (i32, i32) {
    %c0_i32 = arith.constant 0 : i32
    %c0_i32_0 = arith.constant 0 : i32
    return %arg0, %c0_i32 : i32, i32
  }
}

</mosaic_0001>

<llo_original>
// kernel: tpu_custom_call.1
$region0: #{tpu_custom_call.1}
  #allocation0 [shape = 'u32[]', space=smem, size = 0x4, offset = 0x4, fixed_abs, tag = 'smem constant byte address 0x4 - core index']
  #allocation1 [shape = 'u32[144,128]{1,0:T(1,128)}', space=vmem, size = 0x12000, scoped, tag = 'internal scratch']
  #allocation2 [shape = 'f32[8,128]{1,0:T(8,128)}', space=vmem, size = 0x1000, scoped, tag = 'scratch operand']
  #allocation3 [shape = 'f32[8,128]{1,0:T(8,128)}', space=vmem, size = 0x1000, scoped, tag = 'scratch operand']
  #allocation4 [shape = 'f32[1,1]{1,0:T(1,128)S(1)}', space=vmem, size = 0x200, scoped, tag = 'scoped memory for tpu_custom_call.1']
  %s0 = inlined_call_operand.hbm [shape: f32[8,8,512], index: 0, kind: input, shape index: {}]
  %s1 = inlined_call_operand.hbm [shape: f32[8,128], index: 1, kind: input, shape index: {}]
  %s2 = inlined_call_operand.vmem [shape: f32[8,128], index: 2, kind: input, shape index: {}]
  %s3 = inlined_call_operand.hbm [shape: f32[128,512], index: 3, kind: input, shape index: {}]
  %s4 = inlined_call_operand.vmem [shape: f32[8,128], index: 4, kind: input, shape index: {}]
  %s5 = inlined_call_operand.hbm [shape: f32[128,128], index: 5, kind: input, shape index: {}]
  %s6 = inlined_call_operand.vmem [shape: f32[1,128], index: 6, kind: input, shape index: {}]
  %s7 = inlined_call_operand.<no memory space> [shape: f32[1,1], index: 7, kind: input, shape index: {}]
  %s8 = inlined_call_operand.vmem [shape: f32[8,1], index: 8, kind: output, shape index: {}]
  %s9 = sld [smem:[#allocation0]]
  $region66: #{tpu_custom_call.1} parent=0
    _
  %s11 = ssub.s32 1, %s9
  %s12 = scalar_select 0, %s11, %s9
  %v13 = vstv %s7
  %14 = vst [vmem:[#allocation4] sm:$0x1] %v13
  $region1: #{tpu_custom_call.1} parent=0
    #allocation5 [shape = 'u8[131072]{0}', space=vmem, size = 0x20000, scoped, tag = 'input window, operand 0, single buffered']
    #allocation6 [shape = 's32[1]{0}', space=sflag, size = 0x4, scoped, tag = 'scoped memory for tpu_custom_call.1']
    #allocation7 [shape = 'u8[4096]{0}', space=vmem, size = 0x1000, scoped, tag = 'input window, operand 1, single buffered']
    #allocation8 [shape = 's32[1]{0}', space=sflag, size = 0x4, scoped, tag = 'scoped memory for tpu_custom_call.1']
    #allocation9 [shape = 'u8[262144]{0}', space=vmem, size = 0x40000, scoped, tag = 'input window, operand 3, single buffered']
    #allocation10 [shape = 'u8[65536]{0}', space=vmem, size = 0x10000, scoped, tag = 'input window, operand 5, single buffered']
    #allocation11 [shape = 's32[1]{0}', space=sflag, size = 0x4, scoped, tag = 'scoped memory for tpu_custom_call.1']
    %15 = vsyncpa [#allocation6], 0
    %16 = vsyncpa [#allocation8], 0
    %17 = vsyncpa [#allocation11], 0
    // Predicated region
    $region2: #{tpu_custom_call.1} parent=1 // pred_check
      _
    $region3: #{tpu_custom_call.1} parent=1 // pred_check_branch
      %19 = sbr.rel (0) target = $region5
    $region4: #{tpu_custom_call.1} parent=1 // pred_region
      %s21 = ssub.s32 4096, 4096
      %22 = vsyncadd [#allocation6], %s21
      %s23 = sshll.u32 [#allocation5], 4
      %s24 = int_to_ptr.vmem [resolvable:$true] %s23
      %29 = dma.hbm_to_vmem [thread:$0]  %s0, 4096, %s24, [#allocation6], 512, 512, 32
    $region5: #{tpu_custom_call.1} parent=1 // pred_fallthru
      _
    // Predicated region
    $region6: #{tpu_custom_call.1} parent=1 // pred_check
      _
    $region7: #{tpu_custom_call.1} parent=1 // pred_check_branch
      %31 = sbr.rel (0) target = $region9
    $region8: #{tpu_custom_call.1} parent=1 // pred_region
      %s33 = ssub.s32 128, 128
      %34 = vsyncadd [#allocation8], %s33
      %s36 = sshll.u32 [#allocation7], 4
      %s37 = int_to_ptr.vmem [resolvable:$true] %s36
      %39 = dma.hbm_to_vmem [thread:$0]  %s1, 128, %s37, [#allocation8]
    $region9: #{tpu_custom_call.1} parent=1 // pred_fallthru
      _
    // Predicated region
    $region10: #{tpu_custom_call.1} parent=1 // pred_check
      _
    $region11: #{tpu_custom_call.1} parent=1 // pred_check_branch
      %41 = sbr.rel (0) target = $region13
    $region12: #{tpu_custom_call.1} parent=1 // pred_region
      _
    $region13: #{tpu_custom_call.1} parent=1 // pred_fallthru
      _
    // Predicated region
    $region14: #{tpu_custom_call.1} parent=1 // pred_check
      _
    $region15: #{tpu_custom_call.1} parent=1 // pred_check_branch
      %43 = sbr.rel (0) target = $region17
    $region16: #{tpu_custom_call.1} parent=1 // pred_region
      %s45 = ssub.s32 8192, 8192
      %46 = vsyncadd [#allocation8], %s45
      %s47 = sshll.u32 [#allocation9], 4
      %s48 = int_to_ptr.vmem [resolvable:$true] %s47
      %53 = dma.hbm_to_vmem [thread:$0]  %s3, 8192, %s48, [#allocation8], 512, 512, 32
    $region17: #{tpu_custom_call.1} parent=1 // pred_fallthru
      _
    // Predicated region
    $region18: #{tpu_custom_call.1} parent=1 // pred_check
      _
    $region19: #{tpu_custom_call.1} parent=1 // pred_check_branch
      %55 = sbr.rel (0) target = $region21
    $region20: #{tpu_custom_call.1} parent=1 // pred_region
      _
    $region21: #{tpu_custom_call.1} parent=1 // pred_fallthru
      _
    // Predicated region
    $region22: #{tpu_custom_call.1} parent=1 // pred_check
      _
    $region23: #{tpu_custom_call.1} parent=1 // pred_check_branch
      %57 = sbr.rel (0) target = $region25
    $region24: #{tpu_custom_call.1} parent=1 // pred_region
      %s59 = ssub.s32 2048, 2048
      %60 = vsyncadd [#allocation11], %s59
      %s61 = sshll.u32 [#allocation10], 4
      %s62 = int_to_ptr.vmem [resolvable:$true] %s61
      %67 = dma.hbm_to_vmem [thread:$0]  %s5, 2048, %s62, [#allocation11], 128, 128, 8
    $region25: #{tpu_custom_call.1} parent=1 // pred_fallthru
      _
    // Predicated region
    $region26: #{tpu_custom_call.1} parent=1 // pred_check
      _
    $region27: #{tpu_custom_call.1} parent=1 // pred_check_branch
      %69 = sbr.rel (0) target = $region29
    $region28: #{tpu_custom_call.1} parent=1 // pred_region
      _
    $region29: #{tpu_custom_call.1} parent=1 // pred_fallthru
      _
    // Predicated region
    $region30: #{tpu_custom_call.1} parent=1 // pred_check
      _
    $region31: #{tpu_custom_call.1} parent=1 // pred_check_branch
      %71 = sbr.rel (0) target = $region33
    $region32: #{tpu_custom_call.1} parent=1 // pred_region
      _
    $region33: #{tpu_custom_call.1} parent=1 // pred_fallthru
      _
    // Predicated region
    $region34: #{tpu_custom_call.1} parent=1 // pred_check
      _
    $region35: #{tpu_custom_call.1} parent=1 // pred_check_branch
      %73 = sbr.rel (0) target = $region37
    $region36: #{tpu_custom_call.1} parent=1 // pred_region
      %74 = dma.done [#allocation6], 4096
    $region37: #{tpu_custom_call.1} parent=1 // pred_fallthru
      _
    // Predicated region
    $region38: #{tpu_custom_call.1} parent=1 // pred_check
      _
    $region39: #{tpu_custom_call.1} parent=1 // pred_check_branch
      %76 = sbr.rel (0) target = $region41
    $region40: #{tpu_custom_call.1} parent=1 // pred_region
      %77 = dma.done [#allocation8], 128
    $region41: #{tpu_custom_call.1} parent=1 // pred_fallthru
      _
    // Predicated region
    $region42: #{tpu_custom_call.1} parent=1 // pred_check
      _
    $region43: #{tpu_custom_call.1} parent=1 // pred_check_branch
      %79 = sbr.rel (0) target = $region45
    $region44: #{tpu_custom_call.1} parent=1 // pred_region
      %80 = dma.done [#allocation8], 8192
    $region45: #{tpu_custom_call.1} parent=1 // pred_fallthru
      _
    // Predicated region
    $region46: #{tpu_custom_call.1} parent=1 // pred_check
      _
    $region47: #{tpu_custom_call.1} parent=1 // pred_check_branch
      %82 = sbr.rel (0) target = $region49
    $region48: #{tpu_custom_call.1} parent=1 // pred_region
      %83 = dma.done [#allocation11], 2048
    $region49: #{tpu_custom_call.1} parent=1 // pred_fallthru
      _
    %p84 = scmp.eq.s32.totalorder 0, 0
    // Predicated region
    $region50: #{tpu_custom_call.1} parent=1 // pred_check
      %p85 = pneg %p84
    $region51: #{tpu_custom_call.1} parent=1 // pred_check_branch
      %87 = sbr.rel (%p85) target = $region53
    $region52: #{tpu_custom_call.1} parent=1 // pred_region
      %v88 = vld [vmem:[#allocation7] sm:$0xff]
      %89 = vst [vmem:[#allocation2] sm:$0xff] %v88
      %v90 = vld [vmem:[%s2] sm:$0xff]
      %91 = vst [vmem:[#allocation3] sm:$0xff] %v90
    $region53: #{tpu_custom_call.1} parent=1 // pred_fallthru
      _
    %v92 = vld [vmem:[#allocation2] sm:$0xff]
    %v93 = vld [vmem:[#allocation3] sm:$0xff]
    %v94 = vld [vmem:[#allocation5] sm:$0xff]
    %v95 = vld [vmem:[#allocation5 + $0x8] sm:$0xff]
    %v96 = vld [vmem:[#allocation5 + $0x10] sm:$0xff]
    %v97 = vld [vmem:[#allocation5 + $0x18] sm:$0xff]
    %v98 = vld [vmem:[#allocation9] sm:$0xff]
    %v99 = vld [vmem:[#allocation9 + $0x8] sm:$0xff]
    %v100 = vld [vmem:[#allocation9 + $0x10] sm:$0xff]
    %v101 = vld [vmem:[#allocation9 + $0x18] sm:$0xff]
    %v102 = vld [vmem:[#allocation9 + $0x20] sm:$0xff]
    %v103 = vld [vmem:[#allocation9 + $0x28] sm:$0xff]
    %v104 = vld [vmem:[#allocation9 + $0x30] sm:$0xff]
    %v105 = vld [vmem:[#allocation9 + $0x38] sm:$0xff]
    %v106 = vld [vmem:[#allocation9 + $0x40] sm:$0xff]
    %v107 = vld [vmem:[#allocation9 + $0x48] sm:$0xff]
    %v108 = vld [vmem:[#allocation9 + $0x50] sm:$0xff]
    %v109 = vld [vmem:[#allocation9 + $0x58] sm:$0xff]
    %v110 = vld [vmem:[#allocation9 + $0x60] sm:$0xff]
    %v111 = vld [vmem:[#allocation9 + $0x68] sm:$0xff]
    %v112 = vld [vmem:[#allocation9 + $0x70] sm:$0xff]
    %v113 = vld [vmem:[#allocation9 + $0x78] sm:$0xff]
    %v114 = vld [vmem:[#allocation9 + $0x80] sm:$0xff]
    %v115 = vld [vmem:[#allocation9 + $0x88] sm:$0xff]
    %v116 = vld [vmem:[#allocation9 + $0x90] sm:$0xff]
    %v117 = vld [vmem:[#allocation9 + $0x98] sm:$0xff]
    %v118 = vld [vmem:[#allocation9 + $0xa0] sm:$0xff]
    %v119 = vld [vmem:[#allocation9 + $0xa8] sm:$0xff]
    %v120 = vld [vmem:[#allocation9 + $0xb0] sm:$0xff]
    %v121 = vld [vmem:[#allocation9 + $0xb8] sm:$0xff]
    %v122 = vld [vmem:[#allocation9 + $0xc0] sm:$0xff]
    %v123 = vld [vmem:[#allocation9 + $0xc8] sm:$0xff]
    %v124 = vld [vmem:[#allocation9 + $0xd0] sm:$0xff]
    %v125 = vld [vmem:[#allocation9 + $0xd8] sm:$0xff]
    %v126 = vld [vmem:[#allocation9 + $0xe0] sm:$0xff]
    %v127 = vld [vmem:[#allocation9 + $0xe8] sm:$0xff]
    %v128 = vld [vmem:[#allocation9 + $0xf0] sm:$0xff]
    %v129 = vld [vmem:[#allocation9 + $0xf8] sm:$0xff]
    %v130 = vld [vmem:[#allocation9 + $0x100] sm:$0xff]
    %v131 = vld [vmem:[#allocation9 + $0x108] sm:$0xff]
    %v132 = vld [vmem:[#allocation9 + $0x110] sm:$0xff]
    %v133 = vld [vmem:[#allocation9 + $0x118] sm:$0xff]
    %v134 = vld [vmem:[#allocation9 + $0x120] sm:$0xff]
    %v135 = vld [vmem:[#allocation9 + $0x128] sm:$0xff]
    %v136 = vld [vmem:[#allocation9 + $0x130] sm:$0xff]
    %v137 = vld [vmem:[#allocation9 + $0x138] sm:$0xff]
    %v138 = vld [vmem:[#allocation9 + $0x140] sm:$0xff]
    %v139 = vld [vmem:[#allocation9 + $0x148] sm:$0xff]
    %v140 = vld [vmem:[#allocation9 + $0x150] sm:$0xff]
    %v141 = vld [vmem:[#allocation9 + $0x158] sm:$0xff]
    %v142 = vld [vmem:[#allocation9 + $0x160] sm:$0xff]
    %v143 = vld [vmem:[#allocation9 + $0x168] sm:$0xff]
    %v144 = vld [vmem:[#allocation9 + $0x170] sm:$0xff]
    %v145 = vld [vmem:[#allocation9 + $0x178] sm:$0xff]
    %v146 = vld [vmem:[#allocation9 + $0x180] sm:$0xff]
    %v147 = vld [vmem:[#allocation9 + $0x188] sm:$0xff]
    %v148 = vld [vmem:[#allocation9 + $0x190] sm:$0xff]
    %v149 = vld [vmem:[#allocation9 + $0x198] sm:$0xff]
    %v150 = vld [vmem:[#allocation9 + $0x1a0] sm:$0xff]
    %v151 = vld [vmem:[#allocation9 + $0x1a8] sm:$0xff]
    %v152 = vld [vmem:[#allocation9 + $0x1b0] sm:$0xff]
    %v153 = vld [vmem:[#allocation9 + $0x1b8] sm:$0xff]
    %v154 = vld [vmem:[#allocation9 + $0x1c0] sm:$0xff]
    %v155 = vld [vmem:[#allocation9 + $0x1c8] sm:$0xff]
    %v156 = vld [vmem:[#allocation9 + $0x1d0] sm:$0xff]
    %v157 = vld [vmem:[#allocation9 + $0x1d8] sm:$0xff]
    %v158 = vld [vmem:[#allocation9 + $0x1e0] sm:$0xff]
    %v159 = vld [vmem:[#allocation9 + $0x1e8] sm:$0xff]
    %v160 = vld [vmem:[#allocation9 + $0x1f0] sm:$0xff]
    %v161 = vld [vmem:[#allocation9 + $0x1f8] sm:$0xff]
    %162 = vmatprep.subr.mxu0 %v99
    %163 = vmatpush1.msra.mxu0 %v98
    %164 = vmatprep.subr.mxu0 %v103
    %165 = vmatpush1.msra.mxu0 %v102
    %166 = vmatprep.subr.mxu0 %v107
    %167 = vmatpush1.msra.mxu0 %v106
    %168 = vmatprep.subr.mxu0 %v111
    %169 = vmatpush1.msra.mxu0 %v110
    %170 = vmatprep.subr.mxu0 %v115
    %171 = vmatpush1.msra.mxu0 %v114
    %172 = vmatprep.subr.mxu0 %v119
    %173 = vmatpush1.msra.mxu0 %v118
    %174 = vmatprep.subr.mxu0 %v123
    %175 = vmatpush1.msra.mxu0 %v122
    %176 = vmatprep.subr.mxu0 %v127
    %177 = vmatpush1.msra.mxu0 %v126
    %178 = vmatprep.subr.mxu0 %v131
    %179 = vmatpush1.msra.mxu0 %v130
    %180 = vmatprep.subr.mxu0 %v135
    %181 = vmatpush1.msra.mxu0 %v134
    %182 = vmatprep.subr.mxu0 %v139
    %183 = vmatpush1.msra.mxu0 %v138
    %184 = vmatprep.subr.mxu0 %v143
    %185 = vmatpush1.msra.mxu0 %v142
    %186 = vmatprep.subr.mxu0 %v147
    %187 = vmatpush1.msra.mxu0 %v146
    %188 = vmatprep.subr.mxu0 %v151
    %189 = vmatpush1.msra.mxu0 %v150
    %190 = vmatprep.subr.mxu0 %v155
    %191 = vmatpush1.msra.mxu0 %v154
    %192 = vmatprep.subr.mxu0 %v159
    %193 = vmatpush1.msra.mxu0 %v158
    %194 = vmatprep.subr.mxu0 0.0
    %195 = vmatpush1.msra.mxu0 0.0
    %196 = vmatprep.subr.mxu0 0.0
    %197 = vmatpush1.msra.mxu0 0.0
    %198 = vmatprep.subr.mxu0 0.0
    %199 = vmatpush1.msra.mxu0 0.0
    %200 = vmatprep.subr.mxu0 0.0
    %201 = vmatpush1.msra.mxu0 0.0
    %202 = vmatprep.subr.mxu0 0.0
    %203 = vmatpush1.msra.mxu0 0.0
    %204 = vmatprep.subr.mxu0 0.0
    %205 = vmatpush1.msra.mxu0 0.0
    %206 = vmatprep.subr.mxu0 0.0
    %207 = vmatpush1.msra.mxu0 0.0
    %208 = vmatprep.subr.mxu0 0.0
    %209 = vmatpush1.msra.mxu0 0.0
    %210 = vmatprep.subr.mxu0 0.0
    %211 = vmatpush1.msra.mxu0 0.0
    %212 = vmatprep.subr.mxu0 0.0
    %213 = vmatpush1.msra.mxu0 0.0
    %214 = vmatprep.subr.mxu0 0.0
    %215 = vmatpush1.msra.mxu0 0.0
    %216 = vmatprep.subr.mxu0 0.0
    %217 = vmatpush1.msra.mxu0 0.0
    %218 = vmatprep.subr.mxu0 0.0
    %219 = vmatpush1.msra.mxu0 0.0
    %220 = vmatprep.subr.mxu0 0.0
    %221 = vmatpush1.msra.mxu0 0.0
    %222 = vmatprep.subr.mxu0 0.0
    %223 = vmatpush1.msra.mxu0 0.0
    %224 = vmatprep.subr.mxu0 0.0
    %225 = vmatpush1.msra.mxu0 0.0
    %226 = vmatprep.mubr.f32.mxu0 0.0
    %227 = vmatmul.mubr.f32.gmra.mrb[0].mxu0 %v92
    %v228 = vpop.f32.mrb[0].mxu0
    %v229 = vadd.f32 0.0, %v228
    %v230 = vpop.f32.mrb[0].mxu0
    %v231 = vadd.f32 0.0, %v230
    %232 = vdwg.mxu0
    %233 = vmatprep.subr.mxu0 %v101
    %234 = vmatpush1.msra.mxu0 %v100
    %235 = vmatprep.subr.mxu0 %v105
    %236 = vmatpush1.msra.mxu0 %v104
    %237 = vmatprep.subr.mxu0 %v109
    %238 = vmatpush1.msra.mxu0 %v108
    %239 = vmatprep.subr.mxu0 %v113
    %240 = vmatpush1.msra.mxu0 %v112
    %241 = vmatprep.subr.mxu0 %v117
    %242 = vmatpush1.msra.mxu0 %v116
    %243 = vmatprep.subr.mxu0 %v121
    %244 = vmatpush1.msra.mxu0 %v120
    %245 = vmatprep.subr.mxu0 %v125
    %246 = vmatpush1.msra.mxu0 %v124
    %247 = vmatprep.subr.mxu0 %v129
    %248 = vmatpush1.msra.mxu0 %v128
    %249 = vmatprep.subr.mxu0 %v133
    %250 = vmatpush1.msra.mxu0 %v132
    %251 = vmatprep.subr.mxu0 %v137
    %252 = vmatpush1.msra.mxu0 %v136
    %253 = vmatprep.subr.mxu0 %v141
    %254 = vmatpush1.msra.mxu0 %v140
    %255 = vmatprep.subr.mxu0 %v145
    %256 = vmatpush1.msra.mxu0 %v144
    %257 = vmatprep.subr.mxu0 %v149
    %258 = vmatpush1.msra.mxu0 %v148
    %259 = vmatprep.subr.mxu0 %v153
    %260 = vmatpush1.msra.mxu0 %v152
    %261 = vmatprep.subr.mxu0 %v157
    %262 = vmatpush1.msra.mxu0 %v156
    %263 = vmatprep.subr.mxu0 %v161
    %264 = vmatpush1.msra.mxu0 %v160
    %265 = vmatprep.subr.mxu0 0.0
    %266 = vmatpush1.msra.mxu0 0.0
    %267 = vmatprep.subr.mxu0 0.0
    %268 = vmatpush1.msra.mxu0 0.0
    %269 = vmatprep.subr.mxu0 0.0
    %270 = vmatpush1.msra.mxu0 0.0
    %271 = vmatprep.subr.mxu0 0.0
    %272 = vmatpush1.msra.mxu0 0.0
    %273 = vmatprep.subr.mxu0 0.0
    %274 = vmatpush1.msra.mxu0 0.0
    %275 = vmatprep.subr.mxu0 0.0
    %276 = vmatpush1.msra.mxu0 0.0
    %277 = vmatprep.subr.mxu0 0.0
    %278 = vmatpush1.msra.mxu0 0.0
    %279 = vmatprep.subr.mxu0 0.0
    %280 = vmatpush1.msra.mxu0 0.0
    %281 = vmatprep.subr.mxu0 0.0
    %282 = vmatpush1.msra.mxu0 0.0
    %283 = vmatprep.subr.mxu0 0.0
    %284 = vmatpush1.msra.mxu0 0.0
    %285 = vmatprep.subr.mxu0 0.0
    %286 = vmatpush1.msra.mxu0 0.0
    %287 = vmatprep.subr.mxu0 0.0
    %288 = vmatpush1.msra.mxu0 0.0
    %289 = vmatprep.subr.mxu0 0.0
    %290 = vmatpush1.msra.mxu0 0.0
    %291 = vmatprep.subr.mxu0 0.0
    %292 = vmatpush1.msra.mxu0 0.0
    %293 = vmatprep.subr.mxu0 0.0
    %294 = vmatpush1.msra.mxu0 0.0
    %295 = vmatprep.subr.mxu0 0.0
    %296 = vmatpush1.msra.mxu0 0.0
    %297 = vmatprep.mubr.f32.mxu0 0.0
    %298 = vmatmul.mubr.f32.gmra.mrb[0].mxu0 %v92
    %v299 = vpop.f32.mrb[0].mxu0
    %v300 = vadd.f32 0.0, %v299
    %v301 = vpop.f32.mrb[0].mxu0
    %v302 = vadd.f32 0.0, %v301
    %303 = vdwg.mxu0
    %v304 = vadd.f32 %v94, %v229
    %v305 = vadd.f32 %v95, %v231
    %v306 = vadd.f32 %v96, %v300
    %v307 = vadd.f32 %v97, %v302
    %v308 = vxor.u32 %v304, 2147483648
    %v309 = vmul.f32 %v308, 1.442695
    %v310 = vpow.pop %v309
    %v311 = vadd.f32 %v310, 1.0
    %v312 = vrcp.pop %v311
    %v313 = vmul.f32 1.0, %v312
    %v314 = vxor.u32 %v305, 2147483648
    %v315 = vmul.f32 %v314, 1.442695
    %v316 = vpow.pop %v315
    %v317 = vadd.f32 %v316, 1.0
    %v318 = vrcp.pop %v317
    %v319 = vmul.f32 1.0, %v318
    %v320 = vtanh.pop %v306
    %v321 = vxor.u32 %v307, 2147483648
    %v322 = vmul.f32 %v321, 1.442695
    %v323 = vpow.pop %v322
    %v324 = vadd.f32 %v323, 1.0
    %v325 = vrcp.pop %v324
    %v326 = vmul.f32 1.0, %v325
    %v327 = vmul.f32 %v319, %v93
    %v328 = vmul.f32 %v313, %v320
    %v329 = vadd.f32 %v327, %v328
    %v330 = vtanh.pop %v329
    %v331 = vmul.f32 %v326, %v330
    %s332 = scalar_lea.vmem [#allocation5], 32
    %v333 = vld [vmem:[%s332] sm:$0xff]
    %v334 = vld [vmem:[%s332 + $0x8] sm:$0xff]
    %v335 = vld [vmem:[%s332 + $0x10] sm:$0xff]
    %v336 = vld [vmem:[%s332 + $0x18] sm:$0xff]
    %337 = vmatprep.subr.mxu0 %v99
    %338 = vmatpush1.msra.mxu0 %v98
    %339 = vmatprep.subr.mxu0 %v103
    %340 = vmatpush1.msra.mxu0 %v102
    %341 = vmatprep.subr.mxu0 %v107
    %342 = vmatpush1.msra.mxu0 %v106
    %343 = vmatprep.subr.mxu0 %v111
    %344 = vmatpush1.msra.mxu0 %v110
    %345 = vmatprep.subr.mxu0 %v115
    %346 = vmatpush1.msra.mxu0 %v114
    %347 = vmatprep.subr.mxu0 %v119
    %348 = vmatpush1.msra.mxu0 %v118
    %349 = vmatprep.subr.mxu0 %v123
    %350 = vmatpush1.msra.mxu0 %v122
    %351 = vmatprep.subr.mxu0 %v127
    %352 = vmatpush1.msra.mxu0 %v126
    %353 = vmatprep.subr.mxu0 %v131
    %354 = vmatpush1.msra.mxu0 %v130
    %355 = vmatprep.subr.mxu0 %v135
    %356 = vmatpush1.msra.mxu0 %v134
    %357 = vmatprep.subr.mxu0 %v139
    %358 = vmatpush1.msra.mxu0 %v138
    %359 = vmatprep.subr.mxu0 %v143
    %360 = vmatpush1.msra.mxu0 %v142
    %361 = vmatprep.subr.mxu0 %v147
    %362 = vmatpush1.msra.mxu0 %v146
    %363 = vmatprep.subr.mxu0 %v151
    %364 = vmatpush1.msra.mxu0 %v150
    %365 = vmatprep.subr.mxu0 %v155
    %366 = vmatpush1.msra.mxu0 %v154
    %367 = vmatprep.subr.mxu0 %v159
    %368 = vmatpush1.msra.mxu0 %v158
    %369 = vmatprep.subr.mxu0 0.0
    %370 = vmatpush1.msra.mxu0 0.0
    %371 = vmatprep.subr.mxu0 0.0
    %372 = vmatpush1.msra.mxu0 0.0
    %373 = vmatprep.subr.mxu0 0.0
    %374 = vmatpush1.msra.mxu0 0.0
    %375 = vmatprep.subr.mxu0 0.0
    %376 = vmatpush1.msra.mxu0 0.0
    %377 = vmatprep.subr.mxu0 0.0
    %378 = vmatpush1.msra.mxu0 0.0
    %379 = vmatprep.subr.mxu0 0.0
    %380 = vmatpush1.msra.mxu0 0.0
    %381 = vmatprep.subr.mxu0 0.0
    %382 = vmatpush1.msra.mxu0 0.0
    %383 = vmatprep.subr.mxu0 0.0
    %384 = vmatpush1.msra.mxu0 0.0
    %385 = vmatprep.subr.mxu0 0.0
    %386 = vmatpush1.msra.mxu0 0.0
    %387 = vmatprep.subr.mxu0 0.0
    %388 = vmatpush1.msra.mxu0 0.0
    %389 = vmatprep.subr.mxu0 0.0
    %390 = vmatpush1.msra.mxu0 0.0
    %391 = vmatprep.subr.mxu0 0.0
    %392 = vmatpush1.msra.mxu0 0.0
    %393 = vmatprep.subr.mxu0 0.0
    %394 = vmatpush1.msra.mxu0 0.0
    %395 = vmatprep.subr.mxu0 0.0
    %396 = vmatpush1.msra.mxu0 0.0
    %397 = vmatprep.subr.mxu0 0.0
    %398 = vmatpush1.msra.mxu0 0.0
    %399 = vmatprep.subr.mxu0 0.0
    %400 = vmatpush1.msra.mxu0 0.0
    %401 = vmatprep.mubr.f32.mxu0 0.0
    %402 = vmatmul.mubr.f32.gmra.mrb[0].mxu0 %v331
    %v403 = vpop.f32.mrb[0].mxu0
    %v404 = vadd.f32 0.0, %v403
    %v405 = vpop.f32.mrb[0].mxu0
    %v406 = vadd.f32 0.0, %v405
    %407 = vdwg.mxu0
    %408 = vmatprep.subr.mxu0 %v101
    %409 = vmatpush1.msra.mxu0 %v100
    %410 = vmatprep.subr.mxu0 %v105
    %411 = vmatpush1.msra.mxu0 %v104
    %412 = vmatprep.subr.mxu0 %v109
    %413 = vmatpush1.msra.mxu0 %v108
    %414 = vmatprep.subr.mxu0 %v113
    %415 = vmatpush1.msra.mxu0 %v112
    %416 = vmatprep.subr.mxu0 %v117
    %417 = vmatpush1.msra.mxu0 %v116
    %418 = vmatprep.subr.mxu0 %v121
    %419 = vmatpush1.msra.mxu0 %v120
    %420 = vmatprep.subr.mxu0 %v125
    %421 = vmatpush1.msra.mxu0 %v124
    %422 = vmatprep.subr.mxu0 %v129
    %423 = vmatpush1.msra.mxu0 %v128
    %424 = vmatprep.subr.mxu0 %v133
    %425 = vmatpush1.msra.mxu0 %v132
    %426 = vmatprep.subr.mxu0 %v137
    %427 = vmatpush1.msra.mxu0 %v136
    %428 = vmatprep.subr.mxu0 %v141
    %429 = vmatpush1.msra.mxu0 %v140
    %430 = vmatprep.subr.mxu0 %v145
    %431 = vmatpush1.msra.mxu0 %v144
    %432 = vmatprep.subr.mxu0 %v149
    %433 = vmatpush1.msra.mxu0 %v148
    %434 = vmatprep.subr.mxu0 %v153
    %435 = vmatpush1.msra.mxu0 %v152
    %436 = vmatprep.subr.mxu0 %v157
    %437 = vmatpush1.msra.mxu0 %v156
    %438 = vmatprep.subr.mxu0 %v161
    %439 = vmatpush1.msra.mxu0 %v160
    %440 = vmatprep.subr.mxu0 0.0
    %441 = vmatpush1.msra.mxu0 0.0
    %442 = vmatprep.subr.mxu0 0.0
    %443 = vmatpush1.msra.mxu0 0.0
    %444 = vmatprep.subr.mxu0 0.0
    %445 = vmatpush1.msra.mxu0 0.0
    %446 = vmatprep.subr.mxu0 0.0
    %447 = vmatpush1.msra.mxu0 0.0
    %448 = vmatprep.subr.mxu0 0.0
    %449 = vmatpush1.msra.mxu0 0.0
    %450 = vmatprep.subr.mxu0 0.0
    %451 = vmatpush1.msra.mxu0 0.0
    %452 = vmatprep.subr.mxu0 0.0
    %453 = vmatpush1.msra.mxu0 0.0
    %454 = vmatprep.subr.mxu0 0.0
    %455 = vmatpush1.msra.mxu0 0.0
    %456 = vmatprep.subr.mxu0 0.0
    %457 = vmatpush1.msra.mxu0 0.0
    %458 = vmatprep.subr.mxu0 0.0
    %459 = vmatpush1.msra.mxu0 0.0
    %460 = vmatprep.subr.mxu0 0.0
    %461 = vmatpush1.msra.mxu0 0.0
    %462 = vmatprep.subr.mxu0 0.0
    %463 = vmatpush1.msra.mxu0 0.0
    %464 = vmatprep.subr.mxu0 0.0
    %465 = vmatpush1.msra.mxu0 0.0
    %466 = vmatprep.subr.mxu0 0.0
    %467 = vmatpush1.msra.mxu0 0.0
    %468 = vmatprep.subr.mxu0 0.0
    %469 = vmatpush1.msra.mxu0 0.0
    %470 = vmatprep.subr.mxu0 0.0
    %471 = vmatpush1.msra.mxu0 0.0
    %472 = vmatprep.mubr.f32.mxu0 0.0
    %473 = vmatmul.mubr.f32.gmra.mrb[0].mxu0 %v331
    %v474 = vpop.f32.mrb[0].mxu0
    %v475 = vadd.f32 0.0, %v474
    %v476 = vpop.f32.mrb[0].mxu0
    %v477 = vadd.f32 0.0, %v476
    %478 = vdwg.mxu0
    %v479 = vadd.f32 %v333, %v404
    %v480 = vadd.f32 %v334, %v406
    %v481 = vadd.f32 %v335, %v475
    %v482 = vadd.f32 %v336, %v477
    %v483 = vxor.u32 %v479, 2147483648
    %v484 = vmul.f32 %v483, 1.442695
    %v485 = vpow.pop %v484
    %v486 = vadd.f32 %v485, 1.0
    %v487 = vrcp.pop %v486
    %v488 = vmul.f32 1.0, %v487
    %v489 = vxor.u32 %v480, 2147483648
    %v490 = vmul.f32 %v489, 1.442695
    %v491 = vpow.pop %v490
    %v492 = vadd.f32 %v491, 1.0
    %v493 = vrcp.pop %v492
    %v494 = vmul.f32 1.0, %v493
    %v495 = vtanh.pop %v481
    %v496 = vxor.u32 %v482, 2147483648
    %v497 = vmul.f32 %v496, 1.442695
    %v498 = vpow.pop %v497
    %v499 = vadd.f32 %v498, 1.0
    %v500 = vrcp.pop %v499
    %v501 = vmul.f32 1.0, %v500
    %v502 = vmul.f32 %v494, %v329
    %v503 = vmul.f32 %v488, %v495
    %v504 = vadd.f32 %v502, %v503
    %v505 = vtanh.pop %v504
    %v506 = vmul.f32 %v501, %v505
    %s507 = scalar_lea.vmem [#allocation5], 64
    %v508 = vld [vmem:[%s507] sm:$0xff]
    %v509 = vld [vmem:[%s507 + $0x8] sm:$0xff]
    %v510 = vld [vmem:[%s507 + $0x10] sm:$0xff]
    %v511 = vld [vmem:[%s507 + $0x18] sm:$0xff]
    %512 = vmatprep.subr.mxu0 %v99
    %513 = vmatpush1.msra.mxu0 %v98
    %514 = vmatprep.subr.mxu0 %v103
    %515 = vmatpush1.msra.mxu0 %v102
    %516 = vmatprep.subr.mxu0 %v107
    %517 = vmatpush1.msra.mxu0 %v106
    %518 = vmatprep.subr.mxu0 %v111
    %519 = vmatpush1.msra.mxu0 %v110
    %520 = vmatprep.subr.mxu0 %v115
    %521 = vmatpush1.msra.mxu0 %v114
    %522 = vmatprep.subr.mxu0 %v119
    %523 = vmatpush1.msra.mxu0 %v118
    %524 = vmatprep.subr.mxu0 %v123
    %525 = vmatpush1.msra.mxu0 %v122
    %526 = vmatprep.subr.mxu0 %v127
    %527 = vmatpush1.msra.mxu0 %v126
    %528 = vmatprep.subr.mxu0 %v131
    %529 = vmatpush1.msra.mxu0 %v130
    %530 = vmatprep.subr.mxu0 %v135
    %531 = vmatpush1.msra.mxu0 %v134
    %532 = vmatprep.subr.mxu0 %v139
    %533 = vmatpush1.msra.mxu0 %v138
    %534 = vmatprep.subr.mxu0 %v143
    %535 = vmatpush1.msra.mxu0 %v142
    %536 = vmatprep.subr.mxu0 %v147
    %537 = vmatpush1.msra.mxu0 %v146
    %538 = vmatprep.subr.mxu0 %v151
    %539 = vmatpush1.msra.mxu0 %v150
    %540 = vmatprep.subr.mxu0 %v155
    %541 = vmatpush1.msra.mxu0 %v154
    %542 = vmatprep.subr.mxu0 %v159
    %543 = vmatpush1.msra.mxu0 %v158
    %544 = vmatprep.subr.mxu0 0.0
    %545 = vmatpush1.msra.mxu0 0.0
    %546 = vmatprep.subr.mxu0 0.0
    %547 = vmatpush1.msra.mxu0 0.0
    %548 = vmatprep.subr.mxu0 0.0
    %549 = vmatpush1.msra.mxu0 0.0
    %550 = vmatprep.subr.mxu0 0.0
    %551 = vmatpush1.msra.mxu0 0.0
    %552 = vmatprep.subr.mxu0 0.0
    %553 = vmatpush1.msra.mxu0 0.0
    %554 = vmatprep.subr.mxu0 0.0
    %555 = vmatpush1.msra.mxu0 0.0
    %556 = vmatprep.subr.mxu0 0.0
    %557 = vmatpush1.msra.mxu0 0.0
    %558 = vmatprep.subr.mxu0 0.0
    %559 = vmatpush1.msra.mxu0 0.0
    %560 = vmatprep.subr.mxu0 0.0
    %561 = vmatpush1.msra.mxu0 0.0
    %562 = vmatprep.subr.mxu0 0.0
    %563 = vmatpush1.msra.mxu0 0.0
    %564 = vmatprep.subr.mxu0 0.0
    %565 = vmatpush1.msra.mxu0 0.0
    %566 = vmatprep.subr.mxu0 0.0
    %567 = vmatpush1.msra.mxu0 0.0
    %568 = vmatprep.subr.mxu0 0.0
    %569 = vmatpush1.msra.mxu0 0.0
    %570 = vmatprep.subr.mxu0 0.0
    %571 = vmatpush1.msra.mxu0 0.0
    %572 = vmatprep.subr.mxu0 0.0
    %573 = vmatpush1.msra.mxu0 0.0
    %574 = vmatprep.subr.mxu0 0.0
    %575 = vmatpush1.msra.mxu0 0.0
    %576 = vmatprep.mubr.f32.mxu0 0.0
    %577 = vmatmul.mubr.f32.gmra.mrb[0].mxu0 %v506
    %v578 = vpop.f32.mrb[0].mxu0
    %v579 = vadd.f32 0.0, %v578
    %v580 = vpop.f32.mrb[0].mxu0
    %v581 = vadd.f32 0.0, %v580
    %582 = vdwg.mxu0
    %583 = vmatprep.subr.mxu0 %v101
    %584 = vmatpush1.msra.mxu0 %v100
    %585 = vmatprep.subr.mxu0 %v105
    %586 = vmatpush1.msra.mxu0 %v104
    %587 = vmatprep.subr.mxu0 %v109
    %588 = vmatpush1.msra.mxu0 %v108
    %589 = vmatprep.subr.mxu0 %v113
    %590 = vmatpush1.msra.mxu0 %v112
    %591 = vmatprep.subr.mxu0 %v117
    %592 = vmatpush1.msra.mxu0 %v116
    %593 = vmatprep.subr.mxu0 %v121
    %594 = vmatpush1.msra.mxu0 %v120
    %595 = vmatprep.subr.mxu0 %v125
    %596 = vmatpush1.msra.mxu0 %v124
    %597 = vmatprep.subr.mxu0 %v129
    %598 = vmatpush1.msra.mxu0 %v128
    %599 = vmatprep.subr.mxu0 %v133
    %600 = vmatpush1.msra.mxu0 %v132
    %601 = vmatprep.subr.mxu0 %v137
    %602 = vmatpush1.msra.mxu0 %v136
    %603 = vmatprep.subr.mxu0 %v141
    %604 = vmatpush1.msra.mxu0 %v140
    %605 = vmatprep.subr.mxu0 %v145
    %606 = vmatpush1.msra.mxu0 %v144
    %607 = vmatprep.subr.mxu0 %v149
    %608 = vmatpush1.msra.mxu0 %v148
    %609 = vmatprep.subr.mxu0 %v153
    %610 = vmatpush1.msra.mxu0 %v152
    %611 = vmatprep.subr.mxu0 %v157
    %612 = vmatpush1.msra.mxu0 %v156
    %613 = vmatprep.subr.mxu0 %v161
    %614 = vmatpush1.msra.mxu0 %v160
    %615 = vmatprep.subr.mxu0 0.0
    %616 = vmatpush1.msra.mxu0 0.0
    %617 = vmatprep.subr.mxu0 0.0
    %618 = vmatpush1.msra.mxu0 0.0
    %619 = vmatprep.subr.mxu0 0.0
    %620 = vmatpush1.msra.mxu0 0.0
    %621 = vmatprep.subr.mxu0 0.0
    %622 = vmatpush1.msra.mxu0 0.0
    %623 = vmatprep.subr.mxu0 0.0
    %624 = vmatpush1.msra.mxu0 0.0
    %625 = vmatprep.subr.mxu0 0.0
    %626 = vmatpush1.msra.mxu0 0.0
    %627 = vmatprep.subr.mxu0 0.0
    %628 = vmatpush1.msra.mxu0 0.0
    %629 = vmatprep.subr.mxu0 0.0
    %630 = vmatpush1.msra.mxu0 0.0
    %631 = vmatprep.subr.mxu0 0.0
    %632 = vmatpush1.msra.mxu0 0.0
    %633 = vmatprep.subr.mxu0 0.0
    %634 = vmatpush1.msra.mxu0 0.0
    %635 = vmatprep.subr.mxu0 0.0
    %636 = vmatpush1.msra.mxu0 0.0
    %637 = vmatprep.subr.mxu0 0.0
    %638 = vmatpush1.msra.mxu0 0.0
    %639 = vmatprep.subr.mxu0 0.0
    %640 = vmatpush1.msra.mxu0 0.0
    %641 = vmatprep.subr.mxu0 0.0
    %642 = vmatpush1.msra.mxu0 0.0
    %643 = vmatprep.subr.mxu0 0.0
    %644 = vmatpush1.msra.mxu0 0.0
    %645 = vmatprep.subr.mxu0 0.0
    %646 = vmatpush1.msra.mxu0 0.0
    %647 = vmatprep.mubr.f32.mxu0 0.0
    %648 = vmatmul.mubr.f32.gmra.mrb[0].mxu0 %v506
    %v649 = vpop.f32.mrb[0].mxu0
    %v650 = vadd.f32 0.0, %v649
    %v651 = vpop.f32.mrb[0].mxu0
    %v652 = vadd.f32 0.0, %v651
    %653 = vdwg.mxu0
    %v654 = vadd.f32 %v508, %v579
    %v655 = vadd.f32 %v509, %v581
    %v656 = vadd.f32 %v510, %v650
    %v657 = vadd.f32 %v511, %v652
    %v658 = vxor.u32 %v654, 2147483648
    %v659 = vmul.f32 %v658, 1.442695
    %v660 = vpow.pop %v659
    %v661 = vadd.f32 %v660, 1.0
    %v662 = vrcp.pop %v661
    %v663 = vmul.f32 1.0, %v662
    %v664 = vxor.u32 %v655, 2147483648
    %v665 = vmul.f32 %v664, 1.442695
    %v666 = vpow.pop %v665
    %v667 = vadd.f32 %v666, 1.0
    %v668 = vrcp.pop %v667
    %v669 = vmul.f32 1.0, %v668
    %v670 = vtanh.pop %v656
    %v671 = vxor.u32 %v657, 2147483648
    %v672 = vmul.f32 %v671, 1.442695
    %v673 = vpow.pop %v672
    %v674 = vadd.f32 %v673, 1.0
    %v675 = vrcp.pop %v674
    %v676 = vmul.f32 1.0, %v675
    %v677 = vmul.f32 %v669, %v504
    %v678 = vmul.f32 %v663, %v670
    %v679 = vadd.f32 %v677, %v678
    %v680 = vtanh.pop %v679
    %v681 = vmul.f32 %v676, %v680
    %s682 = scalar_lea.vmem [#allocation5], 96
    %v683 = vld [vmem:[%s682] sm:$0xff]
    %v684 = vld [vmem:[%s682 + $0x8] sm:$0xff]
    %v685 = vld [vmem:[%s682 + $0x10] sm:$0xff]
    %v686 = vld [vmem:[%s682 + $0x18] sm:$0xff]
    %687 = vmatprep.subr.mxu0 %v99
    %688 = vmatpush1.msra.mxu0 %v98
    %689 = vmatprep.subr.mxu0 %v103
    %690 = vmatpush1.msra.mxu0 %v102
    %691 = vmatprep.subr.mxu0 %v107
    %692 = vmatpush1.msra.mxu0 %v106
    %693 = vmatprep.subr.mxu0 %v111
    %694 = vmatpush1.msra.mxu0 %v110
    %695 = vmatprep.subr.mxu0 %v115
    %696 = vmatpush1.msra.mxu0 %v114
    %697 = vmatprep.subr.mxu0 %v119
    %698 = vmatpush1.msra.mxu0 %v118
    %699 = vmatprep.subr.mxu0 %v123
    %700 = vmatpush1.msra.mxu0 %v122
    %701 = vmatprep.subr.mxu0 %v127
    %702 = vmatpush1.msra.mxu0 %v126
    %703 = vmatprep.subr.mxu0 %v131
    %704 = vmatpush1.msra.mxu0 %v130
    %705 = vmatprep.subr.mxu0 %v135
    %706 = vmatpush1.msra.mxu0 %v134
    %707 = vmatprep.subr.mxu0 %v139
    %708 = vmatpush1.msra.mxu0 %v138
    %709 = vmatprep.subr.mxu0 %v143
    %710 = vmatpush1.msra.mxu0 %v142
    %711 = vmatprep.subr.mxu0 %v147
    %712 = vmatpush1.msra.mxu0 %v146
    %713 = vmatprep.subr.mxu0 %v151
    %714 = vmatpush1.msra.mxu0 %v150
    %715 = vmatprep.subr.mxu0 %v155
    %716 = vmatpush1.msra.mxu0 %v154
    %717 = vmatprep.subr.mxu0 %v159
    %718 = vmatpush1.msra.mxu0 %v158
    %719 = vmatprep.subr.mxu0 0.0
    %720 = vmatpush1.msra.mxu0 0.0
    %721 = vmatprep.subr.mxu0 0.0
    %722 = vmatpush1.msra.mxu0 0.0
    %723 = vmatprep.subr.mxu0 0.0
    %724 = vmatpush1.msra.mxu0 0.0
    %725 = vmatprep.subr.mxu0 0.0
    %726 = vmatpush1.msra.mxu0 0.0
    %727 = vmatprep.subr.mxu0 0.0
    %728 = vmatpush1.msra.mxu0 0.0
    %729 = vmatprep.subr.mxu0 0.0
    %730 = vmatpush1.msra.mxu0 0.0
    %731 = vmatprep.subr.mxu0 0.0
    %732 = vmatpush1.msra.mxu0 0.0
    %733 = vmatprep.subr.mxu0 0.0
    %734 = vmatpush1.msra.mxu0 0.0
    %735 = vmatprep.subr.mxu0 0.0
    %736 = vmatpush1.msra.mxu0 0.0
    %737 = vmatprep.subr.mxu0 0.0
    %738 = vmatpush1.msra.mxu0 0.0
    %739 = vmatprep.subr.mxu0 0.0
    %740 = vmatpush1.msra.mxu0 0.0
    %741 = vmatprep.subr.mxu0 0.0
    %742 = vmatpush1.msra.mxu0 0.0
    %743 = vmatprep.subr.mxu0 0.0
    %744 = vmatpush1.msra.mxu0 0.0
    %745 = vmatprep.subr.mxu0 0.0
    %746 = vmatpush1.msra.mxu0 0.0
    %747 = vmatprep.subr.mxu0 0.0
    %748 = vmatpush1.msra.mxu0 0.0
    %749 = vmatprep.subr.mxu0 0.0
    %750 = vmatpush1.msra.mxu0 0.0
    %751 = vmatprep.mubr.f32.mxu0 0.0
    %752 = vmatmul.mubr.f32.gmra.mrb[0].mxu0 %v681
    %v753 = vpop.f32.mrb[0].mxu0
    %v754 = vadd.f32 0.0, %v753
    %v755 = vpop.f32.mrb[0].mxu0
    %v756 = vadd.f32 0.0, %v755
    %757 = vdwg.mxu0
    %758 = vmatprep.subr.mxu0 %v101
    %759 = vmatpush1.msra.mxu0 %v100
    %760 = vmatprep.subr.mxu0 %v105
    %761 = vmatpush1.msra.mxu0 %v104
    %762 = vmatprep.subr.mxu0 %v109
    %763 = vmatpush1.msra.mxu0 %v108
    %764 = vmatprep.subr.mxu0 %v113
    %765 = vmatpush1.msra.mxu0 %v112
    %766 = vmatprep.subr.mxu0 %v117
    %767 = vmatpush1.msra.mxu0 %v116
    %768 = vmatprep.subr.mxu0 %v121
    %769 = vmatpush1.msra.mxu0 %v120
    %770 = vmatprep.subr.mxu0 %v125
    %771 = vmatpush1.msra.mxu0 %v124
    %772 = vmatprep.subr.mxu0 %v129
    %773 = vmatpush1.msra.mxu0 %v128
    %774 = vmatprep.subr.mxu0 %v133
    %775 = vmatpush1.msra.mxu0 %v132
    %776 = vmatprep.subr.mxu0 %v137
    %777 = vmatpush1.msra.mxu0 %v136
    %778 = vmatprep.subr.mxu0 %v141
    %779 = vmatpush1.msra.mxu0 %v140
    %780 = vmatprep.subr.mxu0 %v145
    %781 = vmatpush1.msra.mxu0 %v144
    %782 = vmatprep.subr.mxu0 %v149
    %783 = vmatpush1.msra.mxu0 %v148
    %784 = vmatprep.subr.mxu0 %v153
    %785 = vmatpush1.msra.mxu0 %v152
    %786 = vmatprep.subr.mxu0 %v157
    %787 = vmatpush1.msra.mxu0 %v156
    %788 = vmatprep.subr.mxu0 %v161
    %789 = vmatpush1.msra.mxu0 %v160
    %790 = vmatprep.subr.mxu0 0.0
    %791 = vmatpush1.msra.mxu0 0.0
    %792 = vmatprep.subr.mxu0 0.0
    %793 = vmatpush1.msra.mxu0 0.0
    %794 = vmatprep.subr.mxu0 0.0
    %795 = vmatpush1.msra.mxu0 0.0
    %796 = vmatprep.subr.mxu0 0.0
    %797 = vmatpush1.msra.mxu0 0.0
    %798 = vmatprep.subr.mxu0 0.0
    %799 = vmatpush1.msra.mxu0 0.0
    %800 = vmatprep.subr.mxu0 0.0
    %801 = vmatpush1.msra.mxu0 0.0
    %802 = vmatprep.subr.mxu0 0.0
    %803 = vmatpush1.msra.mxu0 0.0
    %804 = vmatprep.subr.mxu0 0.0
    %805 = vmatpush1.msra.mxu0 0.0
    %806 = vmatprep.subr.mxu0 0.0
    %807 = vmatpush1.msra.mxu0 0.0
    %808 = vmatprep.subr.mxu0 0.0
    %809 = vmatpush1.msra.mxu0 0.0
    %810 = vmatprep.subr.mxu0 0.0
    %811 = vmatpush1.msra.mxu0 0.0
    %812 = vmatprep.subr.mxu0 0.0
    %813 = vmatpush1.msra.mxu0 0.0
    %814 = vmatprep.subr.mxu0 0.0
    %815 = vmatpush1.msra.mxu0 0.0
    %816 = vmatprep.subr.mxu0 0.0
    %817 = vmatpush1.msra.mxu0 0.0
    %818 = vmatprep.subr.mxu0 0.0
    %819 = vmatpush1.msra.mxu0 0.0
    %820 = vmatprep.subr.mxu0 0.0
    %821 = vmatpush1.msra.mxu0 0.0
    %822 = vmatprep.mubr.f32.mxu0 0.0
    %823 = vmatmul.mubr.f32.gmra.mrb[0].mxu0 %v681
    %v824 = vpop.f32.mrb[0].mxu0
    %v825 = vadd.f32 0.0, %v824
    %v826 = vpop.f32.mrb[0].mxu0
    %v827 = vadd.f32 0.0, %v826
    %828 = vdwg.mxu0
    %v829 = vadd.f32 %v683, %v754
    %v830 = vadd.f32 %v684, %v756
    %v831 = vadd.f32 %v685, %v825
    %v832 = vadd.f32 %v686, %v827
    %v833 = vxor.u32 %v829, 2147483648
    %v834 = vmul.f32 %v833, 1.442695
    %v835 = vpow.pop %v834
    %v836 = vadd.f32 %v835, 1.0
    %v837 = vrcp.pop %v836
    %v838 = vmul.f32 1.0, %v837
    %v839 = vxor.u32 %v830, 2147483648
    %v840 = vmul.f32 %v839, 1.442695
    %v841 = vpow.pop %v840
    %v842 = vadd.f32 %v841, 1.0
    %v843 = vrcp.pop %v842
    %v844 = vmul.f32 1.0, %v843
    %v845 = vtanh.pop %v831
    %v846 = vxor.u32 %v832, 2147483648
    %v847 = vmul.f32 %v846, 1.442695
    %v848 = vpow.pop %v847
    %v849 = vadd.f32 %v848, 1.0
    %v850 = vrcp.pop %v849
    %v851 = vmul.f32 1.0, %v850
    %v852 = vmul.f32 %v844, %v679
    %v853 = vmul.f32 %v838, %v845
    %v854 = vadd.f32 %v852, %v853
    %v855 = vtanh.pop %v854
    %v856 = vmul.f32 %v851, %v855
    %s857 = scalar_lea.vmem [#allocation5], 128
    %v858 = vld [vmem:[%s857] sm:$0xff]
    %v859 = vld [vmem:[%s857 + $0x8] sm:$0xff]
    %v860 = vld [vmem:[%s857 + $0x10] sm:$0xff]
    %v861 = vld [vmem:[%s857 + $0x18] sm:$0xff]
    %862 = vmatprep.subr.mxu0 %v99
    %863 = vmatpush1.msra.mxu0 %v98
    %864 = vmatprep.subr.mxu0 %v103
    %865 = vmatpush1.msra.mxu0 %v102
    %866 = vmatprep.subr.mxu0 %v107
    %867 = vmatpush1.msra.mxu0 %v106
    %868 = vmatprep.subr.mxu0 %v111
    %869 = vmatpush1.msra.mxu0 %v110
    %870 = vmatprep.subr.mxu0 %v115
    %871 = vmatpush1.msra.mxu0 %v114
    %872 = vmatprep.subr.mxu0 %v119
    %873 = vmatpush1.msra.mxu0 %v118
    %874 = vmatprep.subr.mxu0 %v123
    %875 = vmatpush1.msra.mxu0 %v122
    %876 = vmatprep.subr.mxu0 %v127
    %877 = vmatpush1.msra.mxu0 %v126
    %878 = vmatprep.subr.mxu0 %v131
    %879 = vmatpush1.msra.mxu0 %v130
    %880 = vmatprep.subr.mxu0 %v135
    %881 = vmatpush1.msra.mxu0 %v134
    %882 = vmatprep.subr.mxu0 %v139
    %883 = vmatpush1.msra.mxu0 %v138
    %884 = vmatprep.subr.mxu0 %v143
    %885 = vmatpush1.msra.mxu0 %v142
    %886 = vmatprep.subr.mxu0 %v147
    %887 = vmatpush1.msra.mxu0 %v146
    %888 = vmatprep.subr.mxu0 %v151
    %889 = vmatpush1.msra.mxu0 %v150
    %890 = vmatprep.subr.mxu0 %v155
    %891 = vmatpush1.msra.mxu0 %v154
    %892 = vmatprep.subr.mxu0 %v159
    %893 = vmatpush1.msra.mxu0 %v158
    %894 = vmatprep.subr.mxu0 0.0
    %895 = vmatpush1.msra.mxu0 0.0
    %896 = vmatprep.subr.mxu0 0.0
    %897 = vmatpush1.msra.mxu0 0.0
    %898 = vmatprep.subr.mxu0 0.0
    %899 = vmatpush1.msra.mxu0 0.0
    %900 = vmatprep.subr.mxu0 0.0
    %901 = vmatpush1.msra.mxu0 0.0
    %902 = vmatprep.subr.mxu0 0.0
    %903 = vmatpush1.msra.mxu0 0.0
    %904 = vmatprep.subr.mxu0 0.0
    %905 = vmatpush1.msra.mxu0 0.0
    %906 = vmatprep.subr.mxu0 0.0
    %907 = vmatpush1.msra.mxu0 0.0
    %908 = vmatprep.subr.mxu0 0.0
    %909 = vmatpush1.msra.mxu0 0.0
    %910 = vmatprep.subr.mxu0 0.0
    %911 = vmatpush1.msra.mxu0 0.0
    %912 = vmatprep.subr.mxu0 0.0
    %913 = vmatpush1.msra.mxu0 0.0
    %914 = vmatprep.subr.mxu0 0.0
    %915 = vmatpush1.msra.mxu0 0.0
    %916 = vmatprep.subr.mxu0 0.0
    %917 = vmatpush1.msra.mxu0 0.0
    %918 = vmatprep.subr.mxu0 0.0
    %919 = vmatpush1.msra.mxu0 0.0
    %920 = vmatprep.subr.mxu0 0.0
    %921 = vmatpush1.msra.mxu0 0.0
    %922 = vmatprep.subr.mxu0 0.0
    %923 = vmatpush1.msra.mxu0 0.0
    %924 = vmatprep.subr.mxu0 0.0
    %925 = vmatpush1.msra.mxu0 0.0
    %926 = vmatprep.mubr.f32.mxu0 0.0
    %927 = vmatmul.mubr.f32.gmra.mrb[0].mxu0 %v856
    %v928 = vpop.f32.mrb[0].mxu0
    %v929 = vadd.f32 0.0, %v928
    %v930 = vpop.f32.mrb[0].mxu0
    %v931 = vadd.f32 0.0, %v930
    %932 = vdwg.mxu0
    %933 = vmatprep.subr.mxu0 %v101
    %934 = vmatpush1.msra.mxu0 %v100
    %935 = vmatprep.subr.mxu0 %v105
    %936 = vmatpush1.msra.mxu0 %v104
    %937 = vmatprep.subr.mxu0 %v109
    %938 = vmatpush1.msra.mxu0 %v108
    %939 = vmatprep.subr.mxu0 %v113
    %940 = vmatpush1.msra.mxu0 %v112
    %941 = vmatprep.subr.mxu0 %v117
    %942 = vmatpush1.msra.mxu0 %v116
    %943 = vmatprep.subr.mxu0 %v121
    %944 = vmatpush1.msra.mxu0 %v120
    %945 = vmatprep.subr.mxu0 %v125
    %946 = vmatpush1.msra.mxu0 %v124
    %947 = vmatprep.subr.mxu0 %v129
    %948 = vmatpush1.msra.mxu0 %v128
    %949 = vmatprep.subr.mxu0 %v133
    %950 = vmatpush1.msra.mxu0 %v132
    %951 = vmatprep.subr.mxu0 %v137
    %952 = vmatpush1.msra.mxu0 %v136
    %953 = vmatprep.subr.mxu0 %v141
    %954 = vmatpush1.msra.mxu0 %v140
    %955 = vmatprep.subr.mxu0 %v145
    %956 = vmatpush1.msra.mxu0 %v144
    %957 = vmatprep.subr.mxu0 %v149
    %958 = vmatpush1.msra.mxu0 %v148
    %959 = vmatprep.subr.mxu0 %v153
    %960 = vmatpush1.msra.mxu0 %v152
    %961 = vmatprep.subr.mxu0 %v157
    %962 = vmatpush1.msra.mxu0 %v156
    %963 = vmatprep.subr.mxu0 %v161
    %964 = vmatpush1.msra.mxu0 %v160
    %965 = vmatprep.subr.mxu0 0.0
    %966 = vmatpush1.msra.mxu0 0.0
    %967 = vmatprep.subr.mxu0 0.0
    %968 = vmatpush1.msra.mxu0 0.0
    %969 = vmatprep.subr.mxu0 0.0
    %970 = vmatpush1.msra.mxu0 0.0
    %971 = vmatprep.subr.mxu0 0.0
    %972 = vmatpush1.msra.mxu0 0.0
    %973 = vmatprep.subr.mxu0 0.0
    %974 = vmatpush1.msra.mxu0 0.0
    %975 = vmatprep.subr.mxu0 0.0
    %976 = vmatpush1.msra.mxu0 0.0
    %977 = vmatprep.subr.mxu0 0.0
    %978 = vmatpush1.msra.mxu0 0.0
    %979 = vmatprep.subr.mxu0 0.0
    %980 = vmatpush1.msra.mxu0 0.0
    %981 = vmatprep.subr.mxu0 0.0
    %982 = vmatpush1.msra.mxu0 0.0
    %983 = vmatprep.subr.mxu0 0.0
    %984 = vmatpush1.msra.mxu0 0.0
    %985 = vmatprep.subr.mxu0 0.0
    %986 = vmatpush1.msra.mxu0 0.0
    %987 = vmatprep.subr.mxu0 0.0
    %988 = vmatpush1.msra.mxu0 0.0
    %989 = vmatprep.subr.mxu0 0.0
    %990 = vmatpush1.msra.mxu0 0.0
    %991 = vmatprep.subr.mxu0 0.0
    %992 = vmatpush1.msra.mxu0 0.0
    %993 = vmatprep.subr.mxu0 0.0
    %994 = vmatpush1.msra.mxu0 0.0
    %995 = vmatprep.subr.mxu0 0.0
    %996 = vmatpush1.msra.mxu0 0.0
    %997 = vmatprep.mubr.f32.mxu0 0.0
    %998 = vmatmul.mubr.f32.gmra.mrb[0].mxu0 %v856
    %v999 = vpop.f32.mrb[0].mxu0
    %v1000 = vadd.f32 0.0, %v999
    %v1001 = vpop.f32.mrb[0].mxu0
    %v1002 = vadd.f32 0.0, %v1001
    %1003 = vdwg.mxu0
    %v1004 = vadd.f32 %v858, %v929
    %v1005 = vadd.f32 %v859, %v931
    %v1006 = vadd.f32 %v860, %v1000
    %v1007 = vadd.f32 %v861, %v1002
    %v1008 = vxor.u32 %v1004, 2147483648
    %v1009 = vmul.f32 %v1008, 1.442695
    %v1010 = vpow.pop %v1009
    %v1011 = vadd.f32 %v1010, 1.0
    %v1012 = vrcp.pop %v1011
    %v1013 = vmul.f32 1.0, %v1012
    %v1014 = vxor.u32 %v1005, 2147483648
    %v1015 = vmul.f32 %v1014, 1.442695
    %v1016 = vpow.pop %v1015
    %v1017 = vadd.f32 %v1016, 1.0
    %v1018 = vrcp.pop %v1017
    %v1019 = vmul.f32 1.0, %v1018
    %v1020 = vtanh.pop %v1006
    %v1021 = vxor.u32 %v1007, 2147483648
    %v1022 = vmul.f32 %v1021, 1.442695
    %v1023 = vpow.pop %v1022
    %v1024 = vadd.f32 %v1023, 1.0
    %v1025 = vrcp.pop %v1024
    %v1026 = vmul.f32 1.0, %v1025
    %v1027 = vmul.f32 %v1019, %v854
    %v1028 = vmul.f32 %v1013, %v1020
    %v1029 = vadd.f32 %v1027, %v1028
    %v1030 = vtanh.pop %v1029
    %v1031 = vmul.f32 %v1026, %v1030
    %s1032 = scalar_lea.vmem [#allocation5], 160
    %v1033 = vld [vmem:[%s1032] sm:$0xff]
    %v1034 = vld [vmem:[%s1032 + $0x8] sm:$0xff]
    %v1035 = vld [vmem:[%s1032 + $0x10] sm:$0xff]
    %v1036 = vld [vmem:[%s1032 + $0x18] sm:$0xff]
    %1037 = vmatprep.subr.mxu0 %v99
    %1038 = vmatpush1.msra.mxu0 %v98
    %1039 = vmatprep.subr.mxu0 %v103
    %1040 = vmatpush1.msra.mxu0 %v102
    %1041 = vmatprep.subr.mxu0 %v107
    %1042 = vmatpush1.msra.mxu0 %v106
    %1043 = vmatprep.subr.mxu0 %v111
    %1044 = vmatpush1.msra.mxu0 %v110
    %1045 = vmatprep.subr.mxu0 %v115
    %1046 = vmatpush1.msra.mxu0 %v114
    %1047 = vmatprep.subr.mxu0 %v119
    %1048 = vmatpush1.msra.mxu0 %v118
    %1049 = vmatprep.subr.mxu0 %v123
    %1050 = vmatpush1.msra.mxu0 %v122
    %1051 = vmatprep.subr.mxu0 %v127
    %1052 = vmatpush1.msra.mxu0 %v126
    %1053 = vmatprep.subr.mxu0 %v131
    %1054 = vmatpush1.msra.mxu0 %v130
    %1055 = vmatprep.subr.mxu0 %v135
    %1056 = vmatpush1.msra.mxu0 %v134
    %1057 = vmatprep.subr.mxu0 %v139
    %1058 = vmatpush1.msra.mxu0 %v138
    %1059 = vmatprep.subr.mxu0 %v143
    %1060 = vmatpush1.msra.mxu0 %v142
    %1061 = vmatprep.subr.mxu0 %v147
    %1062 = vmatpush1.msra.mxu0 %v146
    %1063 = vmatprep.subr.mxu0 %v151
    %1064 = vmatpush1.msra.mxu0 %v150
    %1065 = vmatprep.subr.mxu0 %v155
    %1066 = vmatpush1.msra.mxu0 %v154
    %1067 = vmatprep.subr.mxu0 %v159
    %1068 = vmatpush1.msra.mxu0 %v158
    %1069 = vmatprep.subr.mxu0 0.0
    %1070 = vmatpush1.msra.mxu0 0.0
    %1071 = vmatprep.subr.mxu0 0.0
    %1072 = vmatpush1.msra.mxu0 0.0
    %1073 = vmatprep.subr.mxu0 0.0
    %1074 = vmatpush1.msra.mxu0 0.0
    %1075 = vmatprep.subr.mxu0 0.0
    %1076 = vmatpush1.msra.mxu0 0.0
    %1077 = vmatprep.subr.mxu0 0.0
    %1078 = vmatpush1.msra.mxu0 0.0
    %1079 = vmatprep.subr.mxu0 0.0
    %1080 = vmatpush1.msra.mxu0 0.0
    %1081 = vmatprep.subr.mxu0 0.0
    %1082 = vmatpush1.msra.mxu0 0.0
    %1083 = vmatprep.subr.mxu0 0.0
    %1084 = vmatpush1.msra.mxu0 0.0
    %1085 = vmatprep.subr.mxu0 0.0
    %1086 = vmatpush1.msra.mxu0 0.0
    %1087 = vmatprep.subr.mxu0 0.0
    %1088 = vmatpush1.msra.mxu0 0.0
    %1089 = vmatprep.subr.mxu0 0.0
    %1090 = vmatpush1.msra.mxu0 0.0
    %1091 = vmatprep.subr.mxu0 0.0
    %1092 = vmatpush1.msra.mxu0 0.0
    %1093 = vmatprep.subr.mxu0 0.0
    %1094 = vmatpush1.msra.mxu0 0.0
    %1095 = vmatprep.subr.mxu0 0.0
    %1096 = vmatpush1.msra.mxu0 0.0
    %1097 = vmatprep.subr.mxu0 0.0
    %1098 = vmatpush1.msra.mxu0 0.0
    %1099 = vmatprep.subr.mxu0 0.0
    %1100 = vmatpush1.msra.mxu0 0.0
    %1101 = vmatprep.mubr.f32.mxu0 0.0
    %1102 = vmatmul.mubr.f32.gmra.mrb[0].mxu0 %v1031
    %v1103 = vpop.f32.mrb[0].mxu0
    %v1104 = vadd.f32 0.0, %v1103
    %v1105 = vpop.f32.mrb[0].mxu0
    %v1106 = vadd.f32 0.0, %v1105
    %1107 = vdwg.mxu0
    %1108 = vmatprep.subr.mxu0 %v101
    %1109 = vmatpush1.msra.mxu0 %v100
    %1110 = vmatprep.subr.mxu0 %v105
    %1111 = vmatpush1.msra.mxu0 %v104
    %1112 = vmatprep.subr.mxu0 %v109
    %1113 = vmatpush1.msra.mxu0 %v108
    %1114 = vmatprep.subr.mxu0 %v113
    %1115 = vmatpush1.msra.mxu0 %v112
    %1116 = vmatprep.subr.mxu0 %v117
    %1117 = vmatpush1.msra.mxu0 %v116
    %1118 = vmatprep.subr.mxu0 %v121
    %1119 = vmatpush1.msra.mxu0 %v120
    %1120 = vmatprep.subr.mxu0 %v125
    %1121 = vmatpush1.msra.mxu0 %v124
    %1122 = vmatprep.subr.mxu0 %v129
    %1123 = vmatpush1.msra.mxu0 %v128
    %1124 = vmatprep.subr.mxu0 %v133
    %1125 = vmatpush1.msra.mxu0 %v132
    %1126 = vmatprep.subr.mxu0 %v137
    %1127 = vmatpush1.msra.mxu0 %v136
    %1128 = vmatprep.subr.mxu0 %v141
    %1129 = vmatpush1.msra.mxu0 %v140
    %1130 = vmatprep.subr.mxu0 %v145
    %1131 = vmatpush1.msra.mxu0 %v144
    %1132 = vmatprep.subr.mxu0 %v149
    %1133 = vmatpush1.msra.mxu0 %v148
    %1134 = vmatprep.subr.mxu0 %v153
    %1135 = vmatpush1.msra.mxu0 %v152
    %1136 = vmatprep.subr.mxu0 %v157
    %1137 = vmatpush1.msra.mxu0 %v156
    %1138 = vmatprep.subr.mxu0 %v161
    %1139 = vmatpush1.msra.mxu0 %v160
    %1140 = vmatprep.subr.mxu0 0.0
    %1141 = vmatpush1.msra.mxu0 0.0
    %1142 = vmatprep.subr.mxu0 0.0
    %1143 = vmatpush1.msra.mxu0 0.0
    %1144 = vmatprep.subr.mxu0 0.0
    %1145 = vmatpush1.msra.mxu0 0.0
    %1146 = vmatprep.subr.mxu0 0.0
    %1147 = vmatpush1.msra.mxu0 0.0
    %1148 = vmatprep.subr.mxu0 0.0
    %1149 = vmatpush1.msra.mxu0 0.0
    %1150 = vmatprep.subr.mxu0 0.0
    %1151 = vmatpush1.msra.mxu0 0.0
    %1152 = vmatprep.subr.mxu0 0.0
    %1153 = vmatpush1.msra.mxu0 0.0
    %1154 = vmatprep.subr.mxu0 0.0
    %1155 = vmatpush1.msra.mxu0 0.0
    %1156 = vmatprep.subr.mxu0 0.0
    %1157 = vmatpush1.msra.mxu0 0.0
    %1158 = vmatprep.subr.mxu0 0.0
    %1159 = vmatpush1.msra.mxu0 0.0
    %1160 = vmatprep.subr.mxu0 0.0
    %1161 = vmatpush1.msra.mxu0 0.0
    %1162 = vmatprep.subr.mxu0 0.0
    %1163 = vmatpush1.msra.mxu0 0.0
    %1164 = vmatprep.subr.mxu0 0.0
    %1165 = vmatpush1.msra.mxu0 0.0
    %1166 = vmatprep.subr.mxu0 0.0
    %1167 = vmatpush1.msra.mxu0 0.0
    %1168 = vmatprep.subr.mxu0 0.0
    %1169 = vmatpush1.msra.mxu0 0.0
    %1170 = vmatprep.subr.mxu0 0.0
    %1171 = vmatpush1.msra.mxu0 0.0
    %1172 = vmatprep.mubr.f32.mxu0 0.0
    %1173 = vmatmul.mubr.f32.gmra.mrb[0].mxu0 %v1031
    %v1174 = vpop.f32.mrb[0].mxu0
    %v1175 = vadd.f32 0.0, %v1174
    %v1176 = vpop.f32.mrb[0].mxu0
    %v1177 = vadd.f32 0.0, %v1176
    %1178 = vdwg.mxu0
    %v1179 = vadd.f32 %v1033, %v1104
    %v1180 = vadd.f32 %v1034, %v1106
    %v1181 = vadd.f32 %v1035, %v1175
    %v1182 = vadd.f32 %v1036, %v1177
    %v1183 = vxor.u32 %v1179, 2147483648
    %v1184 = vmul.f32 %v1183, 1.442695
    %v1185 = vpow.pop %v1184
    %v1186 = vadd.f32 %v1185, 1.0
    %v1187 = vrcp.pop %v1186
    %v1188 = vmul.f32 1.0, %v1187
    %v1189 = vxor.u32 %v1180, 2147483648
    %v1190 = vmul.f32 %v1189, 1.442695
    %v1191 = vpow.pop %v1190
    %v1192 = vadd.f32 %v1191, 1.0
    %v1193 = vrcp.pop %v1192
    %v1194 = vmul.f32 1.0, %v1193
    %v1195 = vtanh.pop %v1181
    %v1196 = vxor.u32 %v1182, 2147483648
    %v1197 = vmul.f32 %v1196, 1.442695
    %v1198 = vpow.pop %v1197
    %v1199 = vadd.f32 %v1198, 1.0
    %v1200 = vrcp.pop %v1199
    %v1201 = vmul.f32 1.0, %v1200
    %v1202 = vmul.f32 %v1194, %v1029
    %v1203 = vmul.f32 %v1188, %v1195
    %v1204 = vadd.f32 %v1202, %v1203
    %v1205 = vtanh.pop %v1204
    %v1206 = vmul.f32 %v1201, %v1205
    %s1207 = scalar_lea.vmem [#allocation5], 192
    %v1208 = vld [vmem:[%s1207] sm:$0xff]
    %v1209 = vld [vmem:[%s1207 + $0x8] sm:$0xff]
    %v1210 = vld [vmem:[%s1207 + $0x10] sm:$0xff]
    %v1211 = vld [vmem:[%s1207 + $0x18] sm:$0xff]
    %1212 = vmatprep.subr.mxu0 %v99
    %1213 = vmatpush1.msra.mxu0 %v98
    %1214 = vmatprep.subr.mxu0 %v103
    %1215 = vmatpush1.msra.mxu0 %v102
    %1216 = vmatprep.subr.mxu0 %v107
    %1217 = vmatpush1.msra.mxu0 %v106
    %1218 = vmatprep.subr.mxu0 %v111
    %1219 = vmatpush1.msra.mxu0 %v110
    %1220 = vmatprep.subr.mxu0 %v115
    %1221 = vmatpush1.msra.mxu0 %v114
    %1222 = vmatprep.subr.mxu0 %v119
    %1223 = vmatpush1.msra.mxu0 %v118
    %1224 = vmatprep.subr.mxu0 %v123
    %1225 = vmatpush1.msra.mxu0 %v122
    %1226 = vmatprep.subr.mxu0 %v127
    %1227 = vmatpush1.msra.mxu0 %v126
    %1228 = vmatprep.subr.mxu0 %v131
    %1229 = vmatpush1.msra.mxu0 %v130
    %1230 = vmatprep.subr.mxu0 %v135
    %1231 = vmatpush1.msra.mxu0 %v134
    %1232 = vmatprep.subr.mxu0 %v139
    %1233 = vmatpush1.msra.mxu0 %v138
    %1234 = vmatprep.subr.mxu0 %v143
    %1235 = vmatpush1.msra.mxu0 %v142
    %1236 = vmatprep.subr.mxu0 %v147
    %1237 = vmatpush1.msra.mxu0 %v146
    %1238 = vmatprep.subr.mxu0 %v151
    %1239 = vmatpush1.msra.mxu0 %v150
    %1240 = vmatprep.subr.mxu0 %v155
    %1241 = vmatpush1.msra.mxu0 %v154
    %1242 = vmatprep.subr.mxu0 %v159
    %1243 = vmatpush1.msra.mxu0 %v158
    %1244 = vmatprep.subr.mxu0 0.0
    %1245 = vmatpush1.msra.mxu0 0.0
    %1246 = vmatprep.subr.mxu0 0.0
    %1247 = vmatpush1.msra.mxu0 0.0
    %1248 = vmatprep.subr.mxu0 0.0
    %1249 = vmatpush1.msra.mxu0 0.0
    %1250 = vmatprep.subr.mxu0 0.0
    %1251 = vmatpush1.msra.mxu0 0.0
    %1252 = vmatprep.subr.mxu0 0.0
    %1253 = vmatpush1.msra.mxu0 0.0
    %1254 = vmatprep.subr.mxu0 0.0
    %1255 = vmatpush1.msra.mxu0 0.0
    %1256 = vmatprep.subr.mxu0 0.0
    %1257 = vmatpush1.msra.mxu0 0.0
    %1258 = vmatprep.subr.mxu0 0.0
    %1259 = vmatpush1.msra.mxu0 0.0
    %1260 = vmatprep.subr.mxu0 0.0
    %1261 = vmatpush1.msra.mxu0 0.0
    %1262 = vmatprep.subr.mxu0 0.0
    %1263 = vmatpush1.msra.mxu0 0.0
    %1264 = vmatprep.subr.mxu0 0.0
    %1265 = vmatpush1.msra.mxu0 0.0
    %1266 = vmatprep.subr.mxu0 0.0
    %1267 = vmatpush1.msra.mxu0 0.0
    %1268 = vmatprep.subr.mxu0 0.0
    %1269 = vmatpush1.msra.mxu0 0.0
    %1270 = vmatprep.subr.mxu0 0.0
    %1271 = vmatpush1.msra.mxu0 0.0
    %1272 = vmatprep.subr.mxu0 0.0
    %1273 = vmatpush1.msra.mxu0 0.0
    %1274 = vmatprep.subr.mxu0 0.0
    %1275 = vmatpush1.msra.mxu0 0.0
    %1276 = vmatprep.mubr.f32.mxu0 0.0
    %1277 = vmatmul.mubr.f32.gmra.mrb[0].mxu0 %v1206
    %v1278 = vpop.f32.mrb[0].mxu0
    %v1279 = vadd.f32 0.0, %v1278
    %v1280 = vpop.f32.mrb[0].mxu0
    %v1281 = vadd.f32 0.0, %v1280
    %1282 = vdwg.mxu0
    %1283 = vmatprep.subr.mxu0 %v101
    %1284 = vmatpush1.msra.mxu0 %v100
    %1285 = vmatprep.subr.mxu0 %v105
    %1286 = vmatpush1.msra.mxu0 %v104
    %1287 = vmatprep.subr.mxu0 %v109
    %1288 = vmatpush1.msra.mxu0 %v108
    %1289 = vmatprep.subr.mxu0 %v113
    %1290 = vmatpush1.msra.mxu0 %v112
    %1291 = vmatprep.subr.mxu0 %v117
    %1292 = vmatpush1.msra.mxu0 %v116
    %1293 = vmatprep.subr.mxu0 %v121
    %1294 = vmatpush1.msra.mxu0 %v120
    %1295 = vmatprep.subr.mxu0 %v125
    %1296 = vmatpush1.msra.mxu0 %v124
    %1297 = vmatprep.subr.mxu0 %v129
    %1298 = vmatpush1.msra.mxu0 %v128
    %1299 = vmatprep.subr.mxu0 %v133
    %1300 = vmatpush1.msra.mxu0 %v132
    %1301 = vmatprep.subr.mxu0 %v137
    %1302 = vmatpush1.msra.mxu0 %v136
    %1303 = vmatprep.subr.mxu0 %v141
    %1304 = vmatpush1.msra.mxu0 %v140
    %1305 = vmatprep.subr.mxu0 %v145
    %1306 = vmatpush1.msra.mxu0 %v144
    %1307 = vmatprep.subr.mxu0 %v149
    %1308 = vmatpush1.msra.mxu0 %v148
    %1309 = vmatprep.subr.mxu0 %v153
    %1310 = vmatpush1.msra.mxu0 %v152
    %1311 = vmatprep.subr.mxu0 %v157
    %1312 = vmatpush1.msra.mxu0 %v156
    %1313 = vmatprep.subr.mxu0 %v161
    %1314 = vmatpush1.msra.mxu0 %v160
    %1315 = vmatprep.subr.mxu0 0.0
    %1316 = vmatpush1.msra.mxu0 0.0
    %1317 = vmatprep.subr.mxu0 0.0
    %1318 = vmatpush1.msra.mxu0 0.0
    %1319 = vmatprep.subr.mxu0 0.0
    %1320 = vmatpush1.msra.mxu0 0.0
    %1321 = vmatprep.subr.mxu0 0.0
    %1322 = vmatpush1.msra.mxu0 0.0
    %1323 = vmatprep.subr.mxu0 0.0
    %1324 = vmatpush1.msra.mxu0 0.0
    %1325 = vmatprep.subr.mxu0 0.0
    %1326 = vmatpush1.msra.mxu0 0.0
    %1327 = vmatprep.subr.mxu0 0.0
    %1328 = vmatpush1.msra.mxu0 0.0
    %1329 = vmatprep.subr.mxu0 0.0
    %1330 = vmatpush1.msra.mxu0 0.0
    %1331 = vmatprep.subr.mxu0 0.0
    %1332 = vmatpush1.msra.mxu0 0.0
    %1333 = vmatprep.subr.mxu0 0.0
    %1334 = vmatpush1.msra.mxu0 0.0
    %1335 = vmatprep.subr.mxu0 0.0
    %1336 = vmatpush1.msra.mxu0 0.0
    %1337 = vmatprep.subr.mxu0 0.0
    %1338 = vmatpush1.msra.mxu0 0.0
    %1339 = vmatprep.subr.mxu0 0.0
    %1340 = vmatpush1.msra.mxu0 0.0
    %1341 = vmatprep.subr.mxu0 0.0
    %1342 = vmatpush1.msra.mxu0 0.0
    %1343 = vmatprep.subr.mxu0 0.0
    %1344 = vmatpush1.msra.mxu0 0.0
    %1345 = vmatprep.subr.mxu0 0.0
    %1346 = vmatpush1.msra.mxu0 0.0
    %1347 = vmatprep.mubr.f32.mxu0 0.0
    %1348 = vmatmul.mubr.f32.gmra.mrb[0].mxu0 %v1206
    %v1349 = vpop.f32.mrb[0].mxu0
    %v1350 = vadd.f32 0.0, %v1349
    %v1351 = vpop.f32.mrb[0].mxu0
    %v1352 = vadd.f32 0.0, %v1351
    %1353 = vdwg.mxu0
    %v1354 = vadd.f32 %v1208, %v1279
    %v1355 = vadd.f32 %v1209, %v1281
    %v1356 = vadd.f32 %v1210, %v1350
    %v1357 = vadd.f32 %v1211, %v1352
    %v1358 = vxor.u32 %v1354, 2147483648
    %v1359 = vmul.f32 %v1358, 1.442695
    %v1360 = vpow.pop %v1359
    %v1361 = vadd.f32 %v1360, 1.0
    %v1362 = vrcp.pop %v1361
    %v1363 = vmul.f32 1.0, %v1362
    %v1364 = vxor.u32 %v1355, 2147483648
    %v1365 = vmul.f32 %v1364, 1.442695
    %v1366 = vpow.pop %v1365
    %v1367 = vadd.f32 %v1366, 1.0
    %v1368 = vrcp.pop %v1367
    %v1369 = vmul.f32 1.0, %v1368
    %v1370 = vtanh.pop %v1356
    %v1371 = vxor.u32 %v1357, 2147483648
    %v1372 = vmul.f32 %v1371, 1.442695
    %v1373 = vpow.pop %v1372
    %v1374 = vadd.f32 %v1373, 1.0
    %v1375 = vrcp.pop %v1374
    %v1376 = vmul.f32 1.0, %v1375
    %v1377 = vmul.f32 %v1369, %v1204
    %v1378 = vmul.f32 %v1363, %v1370
    %v1379 = vadd.f32 %v1377, %v1378
    %v1380 = vtanh.pop %v1379
    %v1381 = vmul.f32 %v1376, %v1380
    %s1382 = scalar_lea.vmem [#allocation5], 224
    %v1383 = vld [vmem:[%s1382] sm:$0xff]
    %v1384 = vld [vmem:[%s1382 + $0x8] sm:$0xff]
    %v1385 = vld [vmem:[%s1382 + $0x10] sm:$0xff]
    %v1386 = vld [vmem:[%s1382 + $0x18] sm:$0xff]
    %1387 = vmatprep.subr.mxu0 %v99
    %1388 = vmatpush1.msra.mxu0 %v98
    %1389 = vmatprep.subr.mxu0 %v103
    %1390 = vmatpush1.msra.mxu0 %v102
    %1391 = vmatprep.subr.mxu0 %v107
    %1392 = vmatpush1.msra.mxu0 %v106
    %1393 = vmatprep.subr.mxu0 %v111
    %1394 = vmatpush1.msra.mxu0 %v110
    %1395 = vmatprep.subr.mxu0 %v115
    %1396 = vmatpush1.msra.mxu0 %v114
    %1397 = vmatprep.subr.mxu0 %v119
    %1398 = vmatpush1.msra.mxu0 %v118
    %1399 = vmatprep.subr.mxu0 %v123
    %1400 = vmatpush1.msra.mxu0 %v122
    %1401 = vmatprep.subr.mxu0 %v127
    %1402 = vmatpush1.msra.mxu0 %v126
    %1403 = vmatprep.subr.mxu0 %v131
    %1404 = vmatpush1.msra.mxu0 %v130
    %1405 = vmatprep.subr.mxu0 %v135
    %1406 = vmatpush1.msra.mxu0 %v134
    %1407 = vmatprep.subr.mxu0 %v139
    %1408 = vmatpush1.msra.mxu0 %v138
    %1409 = vmatprep.subr.mxu0 %v143
    %1410 = vmatpush1.msra.mxu0 %v142
    %1411 = vmatprep.subr.mxu0 %v147
    %1412 = vmatpush1.msra.mxu0 %v146
    %1413 = vmatprep.subr.mxu0 %v151
    %1414 = vmatpush1.msra.mxu0 %v150
    %1415 = vmatprep.subr.mxu0 %v155
    %1416 = vmatpush1.msra.mxu0 %v154
    %1417 = vmatprep.subr.mxu0 %v159
    %1418 = vmatpush1.msra.mxu0 %v158
    %1419 = vmatprep.subr.mxu0 0.0
    %1420 = vmatpush1.msra.mxu0 0.0
    %1421 = vmatprep.subr.mxu0 0.0
    %1422 = vmatpush1.msra.mxu0 0.0
    %1423 = vmatprep.subr.mxu0 0.0
    %1424 = vmatpush1.msra.mxu0 0.0
    %1425 = vmatprep.subr.mxu0 0.0
    %1426 = vmatpush1.msra.mxu0 0.0
    %1427 = vmatprep.subr.mxu0 0.0
    %1428 = vmatpush1.msra.mxu0 0.0
    %1429 = vmatprep.subr.mxu0 0.0
    %1430 = vmatpush1.msra.mxu0 0.0
    %1431 = vmatprep.subr.mxu0 0.0
    %1432 = vmatpush1.msra.mxu0 0.0
    %1433 = vmatprep.subr.mxu0 0.0
    %1434 = vmatpush1.msra.mxu0 0.0
    %1435 = vmatprep.subr.mxu0 0.0
    %1436 = vmatpush1.msra.mxu0 0.0
    %1437 = vmatprep.subr.mxu0 0.0
    %1438 = vmatpush1.msra.mxu0 0.0
    %1439 = vmatprep.subr.mxu0 0.0
    %1440 = vmatpush1.msra.mxu0 0.0
    %1441 = vmatprep.subr.mxu0 0.0
    %1442 = vmatpush1.msra.mxu0 0.0
    %1443 = vmatprep.subr.mxu0 0.0
    %1444 = vmatpush1.msra.mxu0 0.0
    %1445 = vmatprep.subr.mxu0 0.0
    %1446 = vmatpush1.msra.mxu0 0.0
    %1447 = vmatprep.subr.mxu0 0.0
    %1448 = vmatpush1.msra.mxu0 0.0
    %1449 = vmatprep.subr.mxu0 0.0
    %1450 = vmatpush1.msra.mxu0 0.0
    %1451 = vmatprep.mubr.f32.mxu0 0.0
    %1452 = vmatmul.mubr.f32.gmra.mrb[0].mxu0 %v1381
    %v1453 = vpop.f32.mrb[0].mxu0
    %v1454 = vadd.f32 0.0, %v1453
    %v1455 = vpop.f32.mrb[0].mxu0
    %v1456 = vadd.f32 0.0, %v1455
    %1457 = vdwg.mxu0
    %1458 = vmatprep.subr.mxu0 %v101
    %1459 = vmatpush1.msra.mxu0 %v100
    %1460 = vmatprep.subr.mxu0 %v105
    %1461 = vmatpush1.msra.mxu0 %v104
    %1462 = vmatprep.subr.mxu0 %v109
    %1463 = vmatpush1.msra.mxu0 %v108
    %1464 = vmatprep.subr.mxu0 %v113
    %1465 = vmatpush1.msra.mxu0 %v112
    %1466 = vmatprep.subr.mxu0 %v117
    %1467 = vmatpush1.msra.mxu0 %v116
    %1468 = vmatprep.subr.mxu0 %v121
    %1469 = vmatpush1.msra.mxu0 %v120
    %1470 = vmatprep.subr.mxu0 %v125
    %1471 = vmatpush1.msra.mxu0 %v124
    %1472 = vmatprep.subr.mxu0 %v129
    %1473 = vmatpush1.msra.mxu0 %v128
    %1474 = vmatprep.subr.mxu0 %v133
    %1475 = vmatpush1.msra.mxu0 %v132
    %1476 = vmatprep.subr.mxu0 %v137
    %1477 = vmatpush1.msra.mxu0 %v136
    %1478 = vmatprep.subr.mxu0 %v141
    %1479 = vmatpush1.msra.mxu0 %v140
    %1480 = vmatprep.subr.mxu0 %v145
    %1481 = vmatpush1.msra.mxu0 %v144
    %1482 = vmatprep.subr.mxu0 %v149
    %1483 = vmatpush1.msra.mxu0 %v148
    %1484 = vmatprep.subr.mxu0 %v153
    %1485 = vmatpush1.msra.mxu0 %v152
    %1486 = vmatprep.subr.mxu0 %v157
    %1487 = vmatpush1.msra.mxu0 %v156
    %1488 = vmatprep.subr.mxu0 %v161
    %1489 = vmatpush1.msra.mxu0 %v160
    %1490 = vmatprep.subr.mxu0 0.0
    %1491 = vmatpush1.msra.mxu0 0.0
    %1492 = vmatprep.subr.mxu0 0.0
    %1493 = vmatpush1.msra.mxu0 0.0
    %1494 = vmatprep.subr.mxu0 0.0
    %1495 = vmatpush1.msra.mxu0 0.0
    %1496 = vmatprep.subr.mxu0 0.0
    %1497 = vmatpush1.msra.mxu0 0.0
    %1498 = vmatprep.subr.mxu0 0.0
    %1499 = vmatpush1.msra.mxu0 0.0
    %1500 = vmatprep.subr.mxu0 0.0
    %1501 = vmatpush1.msra.mxu0 0.0
    %1502 = vmatprep.subr.mxu0 0.0
    %1503 = vmatpush1.msra.mxu0 0.0
    %1504 = vmatprep.subr.mxu0 0.0
    %1505 = vmatpush1.msra.mxu0 0.0
    %1506 = vmatprep.subr.mxu0 0.0
    %1507 = vmatpush1.msra.mxu0 0.0
    %1508 = vmatprep.subr.mxu0 0.0
    %1509 = vmatpush1.msra.mxu0 0.0
    %1510 = vmatprep.subr.mxu0 0.0
    %1511 = vmatpush1.msra.mxu0 0.0
    %1512 = vmatprep.subr.mxu0 0.0
    %1513 = vmatpush1.msra.mxu0 0.0
    %1514 = vmatprep.subr.mxu0 0.0
    %1515 = vmatpush1.msra.mxu0 0.0
    %1516 = vmatprep.subr.mxu0 0.0
    %1517 = vmatpush1.msra.mxu0 0.0
    %1518 = vmatprep.subr.mxu0 0.0
    %1519 = vmatpush1.msra.mxu0 0.0
    %1520 = vmatprep.subr.mxu0 0.0
    %1521 = vmatpush1.msra.mxu0 0.0
    %1522 = vmatprep.mubr.f32.mxu0 0.0
    %1523 = vmatmul.mubr.f32.gmra.mrb[0].mxu0 %v1381
    %v1524 = vpop.f32.mrb[0].mxu0
    %v1525 = vadd.f32 0.0, %v1524
    %v1526 = vpop.f32.mrb[0].mxu0
    %v1527 = vadd.f32 0.0, %v1526
    %1528 = vdwg.mxu0
    %v1529 = vadd.f32 %v1383, %v1454
    %v1530 = vadd.f32 %v1384, %v1456
    %v1531 = vadd.f32 %v1385, %v1525
    %v1532 = vadd.f32 %v1386, %v1527
    %v1533 = vxor.u32 %v1529, 2147483648
    %v1534 = vmul.f32 %v1533, 1.442695
    %v1535 = vpow.pop %v1534
    %v1536 = vadd.f32 %v1535, 1.0
    %v1537 = vrcp.pop %v1536
    %v1538 = vmul.f32 1.0, %v1537
    %v1539 = vxor.u32 %v1530, 2147483648
    %v1540 = vmul.f32 %v1539, 1.442695
    %v1541 = vpow.pop %v1540
    %v1542 = vadd.f32 %v1541, 1.0
    %v1543 = vrcp.pop %v1542
    %v1544 = vmul.f32 1.0, %v1543
    %v1545 = vtanh.pop %v1531
    %v1546 = vxor.u32 %v1532, 2147483648
    %v1547 = vmul.f32 %v1546, 1.442695
    %v1548 = vpow.pop %v1547
    %v1549 = vadd.f32 %v1548, 1.0
    %v1550 = vrcp.pop %v1549
    %v1551 = vmul.f32 1.0, %v1550
    %v1552 = vmul.f32 %v1544, %v1379
    %v1553 = vmul.f32 %v1538, %v1545
    %v1554 = vadd.f32 %v1552, %v1553
    %v1555 = vtanh.pop %v1554
    %v1556 = vmul.f32 %v1551, %v1555
    %1557 = vst [vmem:[#allocation2] sm:$0xff] %v1556
    %1558 = vst [vmem:[#allocation3] sm:$0xff] %v1554
    // Predicated region
    $region54: #{tpu_custom_call.1} parent=1 // pred_check
      %p1559 = pneg %p84
    $region55: #{tpu_custom_call.1} parent=1 // pred_check_branch
      %1561 = sbr.rel (%p1559) target = $region57
    $region56: #{tpu_custom_call.1} parent=1 // pred_region
      %v1562 = vmax.f32 %v1556, 0.0
      %v1563 = vld [vmem:[#allocation10] sm:$0xff]
      %v1564 = vld [vmem:[#allocation10 + $0x8] sm:$0xff]
      %v1565 = vld [vmem:[#allocation10 + $0x10] sm:$0xff]
      %v1566 = vld [vmem:[#allocation10 + $0x18] sm:$0xff]
      %v1567 = vld [vmem:[#allocation10 + $0x20] sm:$0xff]
      %v1568 = vld [vmem:[#allocation10 + $0x28] sm:$0xff]
      %v1569 = vld [vmem:[#allocation10 + $0x30] sm:$0xff]
      %v1570 = vld [vmem:[#allocation10 + $0x38] sm:$0xff]
      %v1571 = vld [vmem:[#allocation10 + $0x40] sm:$0xff]
      %v1572 = vld [vmem:[#allocation10 + $0x48] sm:$0xff]
      %v1573 = vld [vmem:[#allocation10 + $0x50] sm:$0xff]
      %v1574 = vld [vmem:[#allocation10 + $0x58] sm:$0xff]
      %v1575 = vld [vmem:[#allocation10 + $0x60] sm:$0xff]
      %v1576 = vld [vmem:[#allocation10 + $0x68] sm:$0xff]
      %v1577 = vld [vmem:[#allocation10 + $0x70] sm:$0xff]
      %v1578 = vld [vmem:[#allocation10 + $0x78] sm:$0xff]
      %v1579 = vld [vmem:[%s4] sm:$0xff]
      %1580 = vmatprep.subr.mxu0 0.0
      %1581 = vmatpush1.msra.mxu0 %v1563
      %1582 = vmatprep.subr.mxu0 0.0
      %1583 = vmatpush1.msra.mxu0 %v1564
      %1584 = vmatprep.subr.mxu0 0.0
      %1585 = vmatpush1.msra.mxu0 %v1565
      %1586 = vmatprep.subr.mxu0 0.0
      %1587 = vmatpush1.msra.mxu0 %v1566
      %1588 = vmatprep.subr.mxu0 0.0
      %1589 = vmatpush1.msra.mxu0 %v1567
      %1590 = vmatprep.subr.mxu0 0.0
      %1591 = vmatpush1.msra.mxu0 %v1568
      %1592 = vmatprep.subr.mxu0 0.0
      %1593 = vmatpush1.msra.mxu0 %v1569
      %1594 = vmatprep.subr.mxu0 0.0
      %1595 = vmatpush1.msra.mxu0 %v1570
      %1596 = vmatprep.subr.mxu0 0.0
      %1597 = vmatpush1.msra.mxu0 %v1571
      %1598 = vmatprep.subr.mxu0 0.0
      %1599 = vmatpush1.msra.mxu0 %v1572
      %1600 = vmatprep.subr.mxu0 0.0
      %1601 = vmatpush1.msra.mxu0 %v1573
      %1602 = vmatprep.subr.mxu0 0.0
      %1603 = vmatpush1.msra.mxu0 %v1574
      %1604 = vmatprep.subr.mxu0 0.0
      %1605 = vmatpush1.msra.mxu0 %v1575
      %1606 = vmatprep.subr.mxu0 0.0
      %1607 = vmatpush1.msra.mxu0 %v1576
      %1608 = vmatprep.subr.mxu0 0.0
      %1609 = vmatpush1.msra.mxu0 %v1577
      %1610 = vmatprep.subr.mxu0 0.0
      %1611 = vmatpush1.msra.mxu0 %v1578
      %1612 = vmatprep.subr.mxu0 0.0
      %1613 = vmatpush1.msra.mxu0 0.0
      %1614 = vmatprep.subr.mxu0 0.0
      %1615 = vmatpush1.msra.mxu0 0.0
      %1616 = vmatprep.subr.mxu0 0.0
      %1617 = vmatpush1.msra.mxu0 0.0
      %1618 = vmatprep.subr.mxu0 0.0
      %1619 = vmatpush1.msra.mxu0 0.0
      %1620 = vmatprep.subr.mxu0 0.0
      %1621 = vmatpush1.msra.mxu0 0.0
      %1622 = vmatprep.subr.mxu0 0.0
      %1623 = vmatpush1.msra.mxu0 0.0
      %1624 = vmatprep.subr.mxu0 0.0
      %1625 = vmatpush1.msra.mxu0 0.0
      %1626 = vmatprep.subr.mxu0 0.0
      %1627 = vmatpush1.msra.mxu0 0.0
      %1628 = vmatprep.subr.mxu0 0.0
      %1629 = vmatpush1.msra.mxu0 0.0
      %1630 = vmatprep.subr.mxu0 0.0
      %1631 = vmatpush1.msra.mxu0 0.0
      %1632 = vmatprep.subr.mxu0 0.0
      %1633 = vmatpush1.msra.mxu0 0.0
      %1634 = vmatprep.subr.mxu0 0.0
      %1635 = vmatpush1.msra.mxu0 0.0
      %1636 = vmatprep.subr.mxu0 0.0
      %1637 = vmatpush1.msra.mxu0 0.0
      %1638 = vmatprep.subr.mxu0 0.0
      %1639 = vmatpush1.msra.mxu0 0.0
      %1640 = vmatprep.subr.mxu0 0.0
      %1641 = vmatpush1.msra.mxu0 0.0
      %1642 = vmatprep.subr.mxu0 0.0
      %1643 = vmatpush1.msra.mxu0 0.0
      %1644 = vmatprep.mubr.f32.mxu0 0.0
      %1645 = vmatmul.mubr.f32.gmra.mrb[0].mxu0 %v1562
      %v1646 = vpop.f32.mrb[0].mxu0
      %v1647 = vadd.f32 %v1579, %v1646
      %v1648 = vpop.f32.mrb[0].mxu0
      %1649 = vdwg.mxu0
      %v1650 = vmax.f32 %v1647, 0.0
      %v1651 = vld [vmem:[%s6] sm:$0x1]
      %v1653 = vlaneseq
      %v1654 = vshrl.u32 %v1653, 7
      %v1655 = vsub.s32 0, %v1654
      %v1656 = vrot.slane %v1651, %v1655
      %v1658 = vmul.f32 %v1650, %v1656
      %1659 = vadd.xlane.f32.xlu0 %v1658
      %v1660 = vpop.xlane.xlu0 %1659
      %v1661 = vld [vmem:[#allocation4] sm:$0x1]
      %v1663 = vlaneseq
      %v1664 = vshrl.u32 %v1663, 7
      %v1665 = vsub.s32 0, %v1664
      %v1666 = vrot.slane %v1661, %v1665
      %v1668 = vadd.f32 %v1660, %v1666
      %vm1669 = vcmask 7168
      %1670 = vst.msk [vmem:[%s8] sm:$0xff] %vm1669, %v1668
    $region57: #{tpu_custom_call.1} parent=1 // pred_fallthru
      _
    // Predicated region
    $region58: #{tpu_custom_call.1} parent=1 // pred_check
      _
    $region59: #{tpu_custom_call.1} parent=1 // pred_check_branch
      %1672 = sbr.rel (0) target = $region61
    $region60: #{tpu_custom_call.1} parent=1 // pred_region
      _
    $region61: #{tpu_custom_call.1} parent=1 // pred_fallthru
      _
    // Predicated region
    $region62: #{tpu_custom_call.1} parent=1 // pred_check
      _
    $region63: #{tpu_custom_call.1} parent=1 // pred_check_branch
      %1674 = sbr.rel (0) target = $region65
    $region64: #{tpu_custom_call.1} parent=1 // pred_region
      _
    $region65: #{tpu_custom_call.1} parent=1 // pred_fallthru
      _
    %1675 = vsyncpa [#allocation6], 1
    %1676 = vsyncpa [#allocation8], 1
    %1677 = vsyncpa [#allocation11], 1

</llo_original>
